<compile_context>
chip_gen: v7x
topology: tpu7x:2x2x1
jax: 0.10.0
libtpu: 0.0.40
codegen_flags: <defaults>
</compile_context>

<pallas_src>
import functools

import jax
import jax.numpy as jnp
from jax.experimental import pallas as pl
from jax.experimental.pallas import tpu as pltpu


def _round_up(x, m):
    return ((x + m - 1) // m) * m


# ----------------------------------------------------------------------------
# Kernel (one batch tile per grid step; weights resident across steps)
# ----------------------------------------------------------------------------
def vae_kernel(
    x_ref, eps_ref,
    w1_ref, b1_ref, w2_ref, b2_ref, w34_ref, b34_ref,        # encoder (+ fused heads)
    wd1_ref, bd1_ref, wd2_ref, bd2_ref, wd3_ref, bd3_ref,    # decoder
    xhat_ref, packed_ref,                                    # outputs
    *, latent,
):
    f32 = jnp.float32
    bf16 = jnp.bfloat16

    x = x_ref[...]                                            # (TB, FEAT_PAD) f32

    # ---- Encoder (bf16 MXU inputs, f32 accumulation, f32 elementwise) ----
    h1 = jnp.dot(x.astype(bf16), w1_ref[...], preferred_element_type=f32) + b1_ref[...]
    h1 = jnp.maximum(h1, 0.0)                                 # ReLU
    h2 = jnp.dot(h1.astype(bf16), w2_ref[...], preferred_element_type=f32) + b2_ref[...]
    h2 = jnp.maximum(h2, 0.0)                                 # ReLU
    # Fused mean | log_var head: one matmul, split afterwards.
    head = jnp.dot(h2.astype(bf16), w34_ref[...], preferred_element_type=f32) + b34_ref[...]
    mean = head[:, :latent]
    log_var = head[:, latent:2 * latent]

    # ---- Reparameterization: z = mean + exp(log_var / 2) * eps ----
    z = mean + jnp.exp(log_var * 0.5) * eps_ref[...]

    # ---- Decoder ----
    d1 = jnp.dot(z.astype(bf16), wd1_ref[...], preferred_element_type=f32) + bd1_ref[...]
    d1 = jnp.maximum(d1, 0.0)                                 # ReLU
    d2 = jnp.dot(d1.astype(bf16), wd2_ref[...], preferred_element_type=f32) + bd2_ref[...]
    d2 = jnp.maximum(d2, 0.0)                                 # ReLU
    logits = jnp.dot(d2.astype(bf16), wd3_ref[...], preferred_element_type=f32) + bd3_ref[...]
    # Sigmoid via EUP slots (exp + approx reciprocal) -> frees VALU on the big slab.
    xhat_ref[...] = pl.reciprocal(1.0 + jnp.exp(-logits), approx=True)

    # ---- Packed lane-dense small-output slab: [ mean | log_var | z | 0-pad ] ----
    packed_ref[...] = jnp.zeros_like(packed_ref)
    packed_ref[:, 0:2 * latent] = head                        # mean | log_var
    packed_ref[:, 2 * latent:3 * latent] = z


# ----------------------------------------------------------------------------
# Wrapper
# ----------------------------------------------------------------------------
def vae_forward(x_nchw, eps, prepared_params, *, tb=None):
    """x_nchw: (B, C, H, W) f32; eps: (B, latent) f32; params from prepare_params()."""
    (w1, b1, w2, b2, w34, b34, wd1, bd1, wd2, bd2, wd3, bd3) = prepared_params

    B = x_nchw.shape[0]
    feat = x_nchw.shape[1] * x_nchw.shape[2] * x_nchw.shape[3]
    latent = eps.shape[1]
    feat_pad = w1.shape[0]
    assert wd3.shape[1] == feat_pad

    # Batch tile: multiple of 8, capped at 256 rows (~0.9 MiB/buffer at 896 f32).
    if tb is None:
        tb = 256 if B >= 256 else _round_up(B, 8)
    b_pad = _round_up(B, tb)
    num_tiles = b_pad // tb

    x_flat = x_nchw.reshape(B, feat).astype(jnp.float32)
    x_p = jnp.pad(x_flat, ((0, b_pad - B), (0, feat_pad - feat)))
    eps_p = jnp.pad(eps.astype(jnp.float32), ((0, b_pad - B), (0, 0)))

    packed_w = 128  # lane-dense packed width for mean|log_var|z

    def tile_spec(width):
        return pl.BlockSpec((tb, width), lambda i: (i, 0))

    def const_spec(shape):  # weights/biases stay resident: same block every step
        return pl.BlockSpec(shape, lambda i: (0,) * len(shape))

    weights = [w1, b1, w2, b2, w34, b34, wd1, bd1, wd2, bd2, wd3, bd3]
    in_specs = [tile_spec(feat_pad), tile_spec(latent)] + [const_spec(w.shape) for w in weights]

    out_shapes = (
        jax.ShapeDtypeStruct((b_pad, feat_pad), jnp.float32),   # x_hat (padded)
        jax.ShapeDtypeStruct((b_pad, packed_w), jnp.float32),   # packed mean|log_var|z
    )
    out_specs = (tile_spec(feat_pad), tile_spec(packed_w))

    xhat_pad, packed = pl.pallas_call(
        functools.partial(vae_kernel, latent=latent),
        grid=(num_tiles,),
        in_specs=in_specs,
        out_specs=out_specs,
        out_shape=out_shapes,
        compiler_params=pltpu.CompilerParams(
            dimension_semantics=("parallel",),   # batch tiles are independent
            vmem_limit_bytes=32 << 20,           # fits v5e/v6e/v7x budgets
        ),
    )(x_p, eps_p, *weights)

    x_hat = xhat_pad[:B, :feat]
    mean = packed[:B, :latent]
    log_var = packed[:B, latent:2 * latent]
    z = packed[:B, 2 * latent:3 * latent]
    return x_hat, mean, log_var, z


# ----------------------------------------------------------------------------
# Parameters: torch-like init, then pad / fuse / cast for the TPU kernel.
# ----------------------------------------------------------------------------
def make_linear(key, fan_in, fan_out):
    kw, kb = jax.random.split(key)
    bound = 1.0 / jnp.sqrt(jnp.float32(fan_in))
    # stored as (in, out) so kernel computes x @ W + b
    w = jax.random.uniform(kw, (fan_in, fan_out), jnp.float32, -bound, bound)
    b = jax.random.uniform(kb, (1, fan_out), jnp.float32, -bound, bound)
    return w, b


def make_params(key, input_size=28, channels=1, latent_size=8):
    feat = channels * input_size * input_size          # 784
    h14 = 14 * 14                                      # 196
    h10 = 10 * 10                                      # 100
    keys = jax.random.split(key, 7)
    w1, b1 = make_linear(keys[0], feat, h14)
    w2, b2 = make_linear(keys[1], h14, h10)
    w3, b3 = make_linear(keys[2], h10, latent_size)    # mean head
    w4, b4 = make_linear(keys[3], h10, latent_size)    # log_var head
    wd1, bd1 = make_linear(keys[4], latent_size, h10)
    wd2, bd2 = make_linear(keys[5], h10, h14)
    wd3, bd3 = make_linear(keys[6], h14, feat)
    return (w1, b1, w2, b2, w3, b3, w4, b4, wd1, bd1, wd2, bd2, wd3, bd3)


def prepare_params(raw, *, feat=784, h14=196, h10=100, latent=8):
    """Zero-pad to lane-friendly dims, fuse mean/log_var heads, cast weights to bf16."""
    (w1, b1, w2, b2, w3, b3, w4, b4, wd1, bd1, wd2, bd2, wd3, bd3) = raw
    feat_p = _round_up(feat, 128)   # 784 -> 896
    h14_p = _round_up(h14, 128)     # 196 -> 256
    h10_p = _round_up(h10, 128)     # 100 -> 128

    def pad_w(w, ip, op):
        return jnp.pad(w, ((0, ip - w.shape[0]), (0, op - w.shape[1]))).astype(jnp.bfloat16)

    def pad_b(b, op):
        return jnp.pad(b, ((0, 0), (0, op - b.shape[1]))).astype(jnp.float32)

    w34 = jnp.concatenate([w3, w4], axis=1)   # (h10, 2*latent) fused head
    b34 = jnp.concatenate([b3, b4], axis=1)   # (1, 2*latent)

    return (
        pad_w(w1, feat_p, h14_p), pad_b(b1, h14_p),
        pad_w(w2, h14_p, h10_p), pad_b(b2, h10_p),
        pad_w(w34, h10_p, 2 * latent), pad_b(b34, 2 * latent),
        pad_w(wd1, latent, h10_p), pad_b(bd1, h10_p),
        pad_w(wd2, h10_p, h14_p), pad_b(bd2, h14_p),
        pad_w(wd3, h14_p, feat_p), pad_b(bd3, feat_p),
    )


# ----------------------------------------------------------------------------
if __name__ == "__main__":
    B, C, H, W = 2, 1, 28, 28
    latent = 8

    root = jax.random.PRNGKey(0)
    k_params, k_x, k_eps = jax.random.split(root, 3)

    raw = make_params(k_params, input_size=H, channels=C, latent_size=latent)
    params = prepare_params(raw, feat=C * H * W, h14=14 * 14, h10=10 * 10, latent=latent)

    x = jax.random.normal(k_x, (B, C, H, W), dtype=jnp.float32)
    # torch.randn(mean.size()) equivalent, drawn deterministically here
    eps = jax.random.normal(k_eps, (B, latent), dtype=jnp.float32)

    x_hat, mean, log_var, z = vae_forward(x, eps, params)
    jax.block_until_ready((x_hat, mean, log_var, z))

    assert x_hat.shape == (B, C * H * W)
    assert mean.shape == (B, latent) and log_var.shape == (B, latent) and z.shape == (B, latent)
    print("KERNEL_OK")
</pallas_src>

<mosaic_0001>
module attributes {stable_mosaic.version = 11 : i64} {
  func.func @vae_kernel(%arg0: i32, %arg1: memref<8x896xf32, #tpu.memory_space<vmem>>, %arg2: memref<8x8xf32, #tpu.memory_space<vmem>>, %arg3: memref<896x256xbf16, #tpu.memory_space<vmem>>, %arg4: memref<1x256xf32, #tpu.memory_space<vmem>>, %arg5: memref<256x128xbf16, #tpu.memory_space<vmem>>, %arg6: memref<1x128xf32, #tpu.memory_space<vmem>>, %arg7: memref<128x16xbf16, #tpu.memory_space<vmem>>, %arg8: memref<1x16xf32, #tpu.memory_space<vmem>>, %arg9: memref<8x128xbf16, #tpu.memory_space<vmem>>, %arg10: memref<1x128xf32, #tpu.memory_space<vmem>>, %arg11: memref<128x256xbf16, #tpu.memory_space<vmem>>, %arg12: memref<1x256xf32, #tpu.memory_space<vmem>>, %arg13: memref<256x896xbf16, #tpu.memory_space<vmem>>, %arg14: memref<1x896xf32, #tpu.memory_space<vmem>>, %arg15: memref<8x896xf32, #tpu.memory_space<vmem>>, %arg16: memref<8x128xf32, #tpu.memory_space<vmem>>) attributes {dimension_semantics = [#tpu.dimension_semantics<parallel>], iteration_bounds = array<i64: 1>, scalar_prefetch = 0 : i64, scratch_operands = 0 : i64, tpu.core_type = #tpu.core_type<tc>, window_params = [{transform_indices = @transform_0, window_bounds = array<i64: 8, 896>}, {transform_indices = @transform_1, window_bounds = array<i64: 8, 8>}, {pipeline_mode = #tpu.pipeline_mode<synchronous>, transform_indices = @transform_2, window_bounds = array<i64: 896, 256>}, {pipeline_mode = #tpu.pipeline_mode<synchronous>, transform_indices = @transform_3, window_bounds = array<i64: 1, 256>}, {pipeline_mode = #tpu.pipeline_mode<synchronous>, transform_indices = @transform_4, window_bounds = array<i64: 256, 128>}, {pipeline_mode = #tpu.pipeline_mode<synchronous>, transform_indices = @transform_5, window_bounds = array<i64: 1, 128>}, {pipeline_mode = #tpu.pipeline_mode<synchronous>, transform_indices = @transform_6, window_bounds = array<i64: 128, 16>}, {pipeline_mode = #tpu.pipeline_mode<synchronous>, transform_indices = @transform_7, window_bounds = array<i64: 1, 16>}, {pipeline_mode = #tpu.pipeline_mode<synchronous>, transform_indices = @transform_8, window_bounds = array<i64: 8, 128>}, {pipeline_mode = #tpu.pipeline_mode<synchronous>, transform_indices = @transform_9, window_bounds = array<i64: 1, 128>}, {pipeline_mode = #tpu.pipeline_mode<synchronous>, transform_indices = @transform_10, window_bounds = array<i64: 128, 256>}, {pipeline_mode = #tpu.pipeline_mode<synchronous>, transform_indices = @transform_11, window_bounds = array<i64: 1, 256>}, {pipeline_mode = #tpu.pipeline_mode<synchronous>, transform_indices = @transform_12, window_bounds = array<i64: 256, 896>}, {pipeline_mode = #tpu.pipeline_mode<synchronous>, transform_indices = @transform_13, window_bounds = array<i64: 1, 896>}, {transform_indices = @transform_14, window_bounds = array<i64: 8, 896>}, {transform_indices = @transform_15, window_bounds = array<i64: 8, 128>}]} {
    %c0 = arith.constant 0 : index
    %c0_0 = arith.constant 0 : index
    %0 = vector.load %arg1[%c0, %c0_0] : memref<8x896xf32, #tpu.memory_space<vmem>>, vector<8x896xf32>
    %1 = arith.truncf %0 : vector<8x896xf32> to vector<8x896xbf16>
    %c0_1 = arith.constant 0 : index
    %c0_2 = arith.constant 0 : index
    %2 = vector.load %arg3[%c0_1, %c0_2] : memref<896x256xbf16, #tpu.memory_space<vmem>>, vector<896x256xbf16>
    %cst = arith.constant dense<0.000000e+00> : vector<8x256xf32>
    %3 = tpu.matmul %1, %2, %cst {dimension_numbers = #tpu.dot_dimension_numbers<[1], [0], [0], [1], [0, 0, 1, 1], [], []>} : vector<8x896xbf16>, vector<896x256xbf16>, vector<8x256xf32> -> vector<8x256xf32>
    %c0_3 = arith.constant 0 : index
    %c0_4 = arith.constant 0 : index
    %4 = vector.load %arg4[%c0_3, %c0_4] : memref<1x256xf32, #tpu.memory_space<vmem>>, vector<1x256xf32>
    %5 = vector.broadcast %4 : vector<1x256xf32> to vector<8x256xf32>
    %6 = arith.addf %3, %5 : vector<8x256xf32>
    %cst_5 = arith.constant 0.000000e+00 : f32
    %7 = vector.broadcast %cst_5 : f32 to vector<8x256xf32>
    %8 = arith.maximumf %6, %7 : vector<8x256xf32>
    %9 = arith.truncf %8 : vector<8x256xf32> to vector<8x256xbf16>
    %c0_6 = arith.constant 0 : index
    %c0_7 = arith.constant 0 : index
    %10 = vector.load %arg5[%c0_6, %c0_7] : memref<256x128xbf16, #tpu.memory_space<vmem>>, vector<256x128xbf16>
    %cst_8 = arith.constant dense<0.000000e+00> : vector<8x128xf32>
    %11 = tpu.matmul %9, %10, %cst_8 {dimension_numbers = #tpu.dot_dimension_numbers<[1], [0], [0], [1], [0, 0, 1, 1], [], []>} : vector<8x256xbf16>, vector<256x128xbf16>, vector<8x128xf32> -> vector<8x128xf32>
    %c0_9 = arith.constant 0 : index
    %c0_10 = arith.constant 0 : index
    %12 = vector.load %arg6[%c0_9, %c0_10] : memref<1x128xf32, #tpu.memory_space<vmem>>, vector<1x128xf32>
    %13 = vector.broadcast %12 : vector<1x128xf32> to vector<8x128xf32>
    %14 = arith.addf %11, %13 : vector<8x128xf32>
    %cst_11 = arith.constant 0.000000e+00 : f32
    %15 = vector.broadcast %cst_11 : f32 to vector<8x128xf32>
    %16 = arith.maximumf %14, %15 : vector<8x128xf32>
    %17 = arith.truncf %16 : vector<8x128xf32> to vector<8x128xbf16>
    %c0_12 = arith.constant 0 : index
    %c0_13 = arith.constant 0 : index
    %18 = vector.load %arg7[%c0_12, %c0_13] : memref<128x16xbf16, #tpu.memory_space<vmem>>, vector<128x16xbf16>
    %cst_14 = arith.constant dense<0.000000e+00> : vector<8x16xf32>
    %19 = tpu.matmul %17, %18, %cst_14 {dimension_numbers = #tpu.dot_dimension_numbers<[1], [0], [0], [1], [0, 0, 1, 1], [], []>} : vector<8x128xbf16>, vector<128x16xbf16>, vector<8x16xf32> -> vector<8x16xf32>
    %c0_15 = arith.constant 0 : index
    %c0_16 = arith.constant 0 : index
    %20 = vector.load %arg8[%c0_15, %c0_16] : memref<1x16xf32, #tpu.memory_space<vmem>>, vector<1x16xf32>
    %21 = vector.broadcast %20 : vector<1x16xf32> to vector<8x16xf32>
    %22 = arith.addf %19, %21 : vector<8x16xf32>
    %23 = vector.extract_strided_slice %22 {offsets = [0, 0], sizes = [8, 8], strides = [1, 1]} : vector<8x16xf32> to vector<8x8xf32>
    %24 = vector.extract_strided_slice %22 {offsets = [0, 8], sizes = [8, 8], strides = [1, 1]} : vector<8x16xf32> to vector<8x8xf32>
    %cst_17 = arith.constant 5.000000e-01 : f32
    %25 = vector.broadcast %cst_17 : f32 to vector<8x8xf32>
    %26 = arith.mulf %24, %25 : vector<8x8xf32>
    %27 = math.exp %26 : vector<8x8xf32>
    %c0_18 = arith.constant 0 : index
    %c0_19 = arith.constant 0 : index
    %28 = vector.load %arg2[%c0_18, %c0_19] : memref<8x8xf32, #tpu.memory_space<vmem>>, vector<8x8xf32>
    %29 = arith.mulf %27, %28 : vector<8x8xf32>
    %30 = arith.addf %23, %29 : vector<8x8xf32>
    %31 = arith.truncf %30 : vector<8x8xf32> to vector<8x8xbf16>
    %c0_20 = arith.constant 0 : index
    %c0_21 = arith.constant 0 : index
    %32 = vector.load %arg9[%c0_20, %c0_21] : memref<8x128xbf16, #tpu.memory_space<vmem>>, vector<8x128xbf16>
    %cst_22 = arith.constant dense<0.000000e+00> : vector<8x128xf32>
    %33 = tpu.matmul %31, %32, %cst_22 {dimension_numbers = #tpu.dot_dimension_numbers<[1], [0], [0], [1], [0, 0, 1, 1], [], []>} : vector<8x8xbf16>, vector<8x128xbf16>, vector<8x128xf32> -> vector<8x128xf32>
    %c0_23 = arith.constant 0 : index
    %c0_24 = arith.constant 0 : index
    %34 = vector.load %arg10[%c0_23, %c0_24] : memref<1x128xf32, #tpu.memory_space<vmem>>, vector<1x128xf32>
    %35 = vector.broadcast %34 : vector<1x128xf32> to vector<8x128xf32>
    %36 = arith.addf %33, %35 : vector<8x128xf32>
    %cst_25 = arith.constant 0.000000e+00 : f32
    %37 = vector.broadcast %cst_25 : f32 to vector<8x128xf32>
    %38 = arith.maximumf %36, %37 : vector<8x128xf32>
    %39 = arith.truncf %38 : vector<8x128xf32> to vector<8x128xbf16>
    %c0_26 = arith.constant 0 : index
    %c0_27 = arith.constant 0 : index
    %40 = vector.load %arg11[%c0_26, %c0_27] : memref<128x256xbf16, #tpu.memory_space<vmem>>, vector<128x256xbf16>
    %cst_28 = arith.constant dense<0.000000e+00> : vector<8x256xf32>
    %41 = tpu.matmul %39, %40, %cst_28 {dimension_numbers = #tpu.dot_dimension_numbers<[1], [0], [0], [1], [0, 0, 1, 1], [], []>} : vector<8x128xbf16>, vector<128x256xbf16>, vector<8x256xf32> -> vector<8x256xf32>
    %c0_29 = arith.constant 0 : index
    %c0_30 = arith.constant 0 : index
    %42 = vector.load %arg12[%c0_29, %c0_30] : memref<1x256xf32, #tpu.memory_space<vmem>>, vector<1x256xf32>
    %43 = vector.broadcast %42 : vector<1x256xf32> to vector<8x256xf32>
    %44 = arith.addf %41, %43 : vector<8x256xf32>
    %cst_31 = arith.constant 0.000000e+00 : f32
    %45 = vector.broadcast %cst_31 : f32 to vector<8x256xf32>
    %46 = arith.maximumf %44, %45 : vector<8x256xf32>
    %47 = arith.truncf %46 : vector<8x256xf32> to vector<8x256xbf16>
    %c0_32 = arith.constant 0 : index
    %c0_33 = arith.constant 0 : index
    %48 = vector.load %arg13[%c0_32, %c0_33] : memref<256x896xbf16, #tpu.memory_space<vmem>>, vector<256x896xbf16>
    %cst_34 = arith.constant dense<0.000000e+00> : vector<8x896xf32>
    %49 = tpu.matmul %47, %48, %cst_34 {dimension_numbers = #tpu.dot_dimension_numbers<[1], [0], [0], [1], [0, 0, 1, 1], [], []>} : vector<8x256xbf16>, vector<256x896xbf16>, vector<8x896xf32> -> vector<8x896xf32>
    %c0_35 = arith.constant 0 : index
    %c0_36 = arith.constant 0 : index
    %50 = vector.load %arg14[%c0_35, %c0_36] : memref<1x896xf32, #tpu.memory_space<vmem>>, vector<1x896xf32>
    %51 = vector.broadcast %50 : vector<1x896xf32> to vector<8x896xf32>
    %52 = arith.addf %49, %51 : vector<8x896xf32>
    %cst_37 = arith.constant 0.000000e+00 : f32
    %53 = vector.broadcast %cst_37 : f32 to vector<8x896xf32>
    %54 = arith.subf %53, %52 : vector<8x896xf32>
    %55 = math.exp %54 : vector<8x896xf32>
    %cst_38 = arith.constant 1.000000e+00 : f32
    %56 = vector.broadcast %cst_38 : f32 to vector<8x896xf32>
    %57 = arith.addf %56, %55 : vector<8x896xf32>
    %58 = tpu.reciprocal %57 {approx = true} : vector<8x896xf32> -> vector<8x896xf32>
    %c0_39 = arith.constant 0 : index
    %c0_40 = arith.constant 0 : index
    %59 = vector.load %arg15[%c0_39, %c0_40] : memref<8x896xf32, #tpu.memory_space<vmem>>, vector<8x896xf32>
    tpu.vector_store %arg15[%c0_39, %c0_40], %58 {strides = array<i32>} : memref<8x896xf32, #tpu.memory_space<vmem>>, vector<8x896xf32>,
    %cst_41 = arith.constant 0.000000e+00 : f32
    %60 = vector.broadcast %cst_41 : f32 to vector<8x128xf32>
    %c0_42 = arith.constant 0 : index
    %c0_43 = arith.constant 0 : index
    %61 = vector.load %arg16[%c0_42, %c0_43] : memref<8x128xf32, #tpu.memory_space<vmem>>, vector<8x128xf32>
    tpu.vector_store %arg16[%c0_42, %c0_43], %60 {strides = array<i32>} : memref<8x128xf32, #tpu.memory_space<vmem>>, vector<8x128xf32>,
    %c0_44 = arith.constant 0 : index
    %c0_45 = arith.constant 0 : index
    %62 = vector.load %arg16[%c0_44, %c0_45] : memref<8x128xf32, #tpu.memory_space<vmem>>, vector<8x16xf32>
    tpu.vector_store %arg16[%c0_44, %c0_45], %22 {strides = array<i32>} : memref<8x128xf32, #tpu.memory_space<vmem>>, vector<8x16xf32>,
    %c0_46 = arith.constant 0 : index
    %c16 = arith.constant 16 : index
    %63 = vector.load %arg16[%c0_46, %c16] : memref<8x128xf32, #tpu.memory_space<vmem>>, vector<8x8xf32>
    tpu.vector_store %arg16[%c0_46, %c16], %30 {strides = array<i32>} : memref<8x128xf32, #tpu.memory_space<vmem>>, vector<8x8xf32>,
    return
  }
  func.func @transform_0(%arg0: i32) -> (i32, i32) {
    %c0_i32 = arith.constant 0 : i32
    %c0_i32_0 = arith.constant 0 : i32
    return %arg0, %c0_i32 : i32, i32
  }
  func.func @transform_1(%arg0: i32) -> (i32, i32) {
    %c0_i32 = arith.constant 0 : i32
    %c0_i32_0 = arith.constant 0 : i32
    return %arg0, %c0_i32 : i32, i32
  }
  func.func @transform_2(%arg0: i32) -> (i32, i32) {
    %c0_i32 = arith.constant 0 : i32
    %c0_i32_0 = arith.constant 0 : i32
    %c0_i32_1 = arith.constant 0 : i32
    return %c0_i32, %c0_i32_0 : i32, i32
  }
  func.func @transform_3(%arg0: i32) -> (i32, i32) {
    %c0_i32 = arith.constant 0 : i32
    %c0_i32_0 = arith.constant 0 : i32
    %c0_i32_1 = arith.constant 0 : i32
    return %c0_i32, %c0_i32_0 : i32, i32
  }
  func.func @transform_4(%arg0: i32) -> (i32, i32) {
    %c0_i32 = arith.constant 0 : i32
    %c0_i32_0 = arith.constant 0 : i32
    %c0_i32_1 = arith.constant 0 : i32
    return %c0_i32, %c0_i32_0 : i32, i32
  }
  func.func @transform_5(%arg0: i32) -> (i32, i32) {
    %c0_i32 = arith.constant 0 : i32
    %c0_i32_0 = arith.constant 0 : i32
    %c0_i32_1 = arith.constant 0 : i32
    return %c0_i32, %c0_i32_0 : i32, i32
  }
  func.func @transform_6(%arg0: i32) -> (i32, i32) {
    %c0_i32 = arith.constant 0 : i32
    %c0_i32_0 = arith.constant 0 : i32
    %c0_i32_1 = arith.constant 0 : i32
    return %c0_i32, %c0_i32_0 : i32, i32
  }
  func.func @transform_7(%arg0: i32) -> (i32, i32) {
    %c0_i32 = arith.constant 0 : i32
    %c0_i32_0 = arith.constant 0 : i32
    %c0_i32_1 = arith.constant 0 : i32
    return %c0_i32, %c0_i32_0 : i32, i32
  }
  func.func @transform_8(%arg0: i32) -> (i32, i32) {
    %c0_i32 = arith.constant 0 : i32
    %c0_i32_0 = arith.constant 0 : i32
    %c0_i32_1 = arith.constant 0 : i32
    return %c0_i32, %c0_i32_0 : i32, i32
  }
  func.func @transform_9(%arg0: i32) -> (i32, i32) {
    %c0_i32 = arith.constant 0 : i32
    %c0_i32_0 = arith.constant 0 : i32
    %c0_i32_1 = arith.constant 0 : i32
    return %c0_i32, %c0_i32_0 : i32, i32
  }
  func.func @transform_10(%arg0: i32) -> (i32, i32) {
    %c0_i32 = arith.constant 0 : i32
    %c0_i32_0 = arith.constant 0 : i32
    %c0_i32_1 = arith.constant 0 : i32
    return %c0_i32, %c0_i32_0 : i32, i32
  }
  func.func @transform_11(%arg0: i32) -> (i32, i32) {
    %c0_i32 = arith.constant 0 : i32
    %c0_i32_0 = arith.constant 0 : i32
    %c0_i32_1 = arith.constant 0 : i32
    return %c0_i32, %c0_i32_0 : i32, i32
  }
  func.func @transform_12(%arg0: i32) -> (i32, i32) {
    %c0_i32 = arith.constant 0 : i32
    %c0_i32_0 = arith.constant 0 : i32
    %c0_i32_1 = arith.constant 0 : i32
    return %c0_i32, %c0_i32_0 : i32, i32
  }
  func.func @transform_13(%arg0: i32) -> (i32, i32) {
    %c0_i32 = arith.constant 0 : i32
    %c0_i32_0 = arith.constant 0 : i32
    %c0_i32_1 = arith.constant 0 : i32
    return %c0_i32, %c0_i32_0 : i32, i32
  }
  func.func @transform_14(%arg0: i32) -> (i32, i32) {
    %c0_i32 = arith.constant 0 : i32
    %c0_i32_0 = arith.constant 0 : i32
    return %arg0, %c0_i32 : i32, i32
  }
  func.func @transform_15(%arg0: i32) -> (i32, i32) {
    %c0_i32 = arith.constant 0 : i32
    %c0_i32_0 = arith.constant 0 : i32
    return %arg0, %c0_i32 : i32, i32
  }
}

</mosaic_0001>

<llo_original>
// kernel: tpu_custom_call.1
$region0: #{tpu_custom_call.1}
  #allocation0 [shape = 'u32[]', space=smem, size = 0x4, offset = 0x4, fixed_abs, tag = 'smem constant byte address 0x4 - core index']
  #allocation1 [shape = 'u32[144,128]{1,0:T(1,128)}', space=vmem, size = 0x12000, scoped, tag = 'internal scratch']
  %s0 = inlined_call_operand.vmem [shape: f32[8,896], index: 0, kind: input, shape index: {}]
  %s1 = inlined_call_operand.vmem [shape: f32[8,8], index: 1, kind: input, shape index: {}]
  %s2 = inlined_call_operand.hbm [shape: bf16[896,256], index: 2, kind: input, shape index: {}]
  %s3 = inlined_call_operand.vmem [shape: f32[1,256], index: 3, kind: input, shape index: {}]
  %s4 = inlined_call_operand.hbm [shape: bf16[256,128], index: 4, kind: input, shape index: {}]
  %s5 = inlined_call_operand.vmem [shape: f32[1,128], index: 5, kind: input, shape index: {}]
  %s6 = inlined_call_operand.vmem [shape: bf16[128,16], index: 6, kind: input, shape index: {}]
  %s7 = inlined_call_operand.vmem [shape: f32[1,16], index: 7, kind: input, shape index: {}]
  %s8 = inlined_call_operand.vmem [shape: bf16[8,128], index: 8, kind: input, shape index: {}]
  %s9 = inlined_call_operand.vmem [shape: f32[1,128], index: 9, kind: input, shape index: {}]
  %s10 = inlined_call_operand.hbm [shape: bf16[128,256], index: 10, kind: input, shape index: {}]
  %s11 = inlined_call_operand.vmem [shape: f32[1,256], index: 11, kind: input, shape index: {}]
  %s12 = inlined_call_operand.hbm [shape: bf16[256,896], index: 12, kind: input, shape index: {}]
  %s13 = inlined_call_operand.vmem [shape: f32[1,896], index: 13, kind: input, shape index: {}]
  %s14 = inlined_call_operand.hbm [shape: f32[8,896], index: 14, kind: output, shape index: {0}]
  %s15 = inlined_call_operand.hbm [shape: f32[8,128], index: 15, kind: output, shape index: {1}]
  %16 = xla_tuple %s14, %s15
  %s17 = sld [smem:[#allocation0]]
  $region90: #{tpu_custom_call.1} parent=0
    _
  %s19 = ssub.s32 1, %s17
  %s20 = scalar_select 0, %s19, %s17
  $region1: #{tpu_custom_call.1} parent=0
    #allocation2 [shape = 'u8[458752]{0}', space=vmem, size = 0x70000, scoped, tag = 'input window, operand 2, single buffered']
    #allocation3 [shape = 's32[1]{0}', space=sflag, size = 0x4, scoped, tag = 'scoped memory for tpu_custom_call.1']
    #allocation4 [shape = 's32[1]{0}', space=sflag, size = 0x4, scoped, tag = 'scoped memory for tpu_custom_call.1']
    #allocation5 [shape = 'u8[65536]{0}', space=vmem, size = 0x10000, scoped, tag = 'input window, operand 4, single buffered']
    #allocation6 [shape = 's32[1]{0}', space=sflag, size = 0x4, scoped, tag = 'scoped memory for tpu_custom_call.1']
    #allocation7 [shape = 'u8[65536]{0}', space=vmem, size = 0x10000, scoped, tag = 'input window, operand 10, single buffered']
    #allocation8 [shape = 'u8[458752]{0}', space=vmem, size = 0x70000, scoped, tag = 'input window, operand 12, single buffered']
    #allocation9 [shape = 's32[1]{0}', space=sflag, size = 0x4, scoped, tag = 'scoped memory for tpu_custom_call.1']
    #allocation10 [shape = 'u8[28672]{0}', space=vmem, size = 0x7000, scoped, tag = 'output window, operand 0, single buffered']
    #allocation11 [shape = 'u8[4096]{0}', space=vmem, size = 0x1000, scoped, tag = 'output window, operand 1, single buffered']
    #allocation12 [shape = 's32[1]{0}', space=sflag, size = 0x4, scoped, tag = 'scoped memory for tpu_custom_call.1']
    %21 = vsyncpa [#allocation3], 0
    %22 = vsyncpa [#allocation6], 0
    %23 = vsyncpa [#allocation9], 0
    %24 = vsyncpa [#allocation4], 0
    %25 = vsyncpa [#allocation12], 0
    // Predicated region
    $region2: #{tpu_custom_call.1} parent=1 // pred_check
      _
    $region3: #{tpu_custom_call.1} parent=1 // pred_check_branch
      %27 = sbr.rel (0) target = $region5
    $region4: #{tpu_custom_call.1} parent=1 // pred_region
      _
    $region5: #{tpu_custom_call.1} parent=1 // pred_fallthru
      _
    // Predicated region
    $region6: #{tpu_custom_call.1} parent=1 // pred_check
      _
    $region7: #{tpu_custom_call.1} parent=1 // pred_check_branch
      %29 = sbr.rel (0) target = $region9
    $region8: #{tpu_custom_call.1} parent=1 // pred_region
      _
    $region9: #{tpu_custom_call.1} parent=1 // pred_fallthru
      _
    // Predicated region
    $region10: #{tpu_custom_call.1} parent=1 // pred_check
      _
    $region11: #{tpu_custom_call.1} parent=1 // pred_check_branch
      %31 = sbr.rel (0) target = $region13
    $region12: #{tpu_custom_call.1} parent=1 // pred_region
      %s33 = ssub.s32 14336, 14336
      %34 = vsyncadd [#allocation3], %s33
      %s35 = sshll.u32 [#allocation2], 4
      %s36 = int_to_ptr.vmem [resolvable:$true] %s35
      %41 = dma.hbm_to_vmem [thread:$0]  %s2, 14336, %s36, [#allocation3], 128, 128, 8
    $region13: #{tpu_custom_call.1} parent=1 // pred_fallthru
      _
    // Predicated region
    $region14: #{tpu_custom_call.1} parent=1 // pred_check
      _
    $region15: #{tpu_custom_call.1} parent=1 // pred_check_branch
      %43 = sbr.rel (0) target = $region17
    $region16: #{tpu_custom_call.1} parent=1 // pred_region
      _
    $region17: #{tpu_custom_call.1} parent=1 // pred_fallthru
      _
    // Predicated region
    $region18: #{tpu_custom_call.1} parent=1 // pred_check
      _
    $region19: #{tpu_custom_call.1} parent=1 // pred_check_branch
      %45 = sbr.rel (0) target = $region21
    $region20: #{tpu_custom_call.1} parent=1 // pred_region
      %s47 = ssub.s32 2048, 2048
      %48 = vsyncadd [#allocation6], %s47
      %s49 = sshll.u32 [#allocation5], 4
      %s50 = int_to_ptr.vmem [resolvable:$true] %s49
      %55 = dma.hbm_to_vmem [thread:$0]  %s4, 2048, %s50, [#allocation6], 64, 64, 4
    $region21: #{tpu_custom_call.1} parent=1 // pred_fallthru
      _
    // Predicated region
    $region22: #{tpu_custom_call.1} parent=1 // pred_check
      _
    $region23: #{tpu_custom_call.1} parent=1 // pred_check_branch
      %57 = sbr.rel (0) target = $region25
    $region24: #{tpu_custom_call.1} parent=1 // pred_region
      _
    $region25: #{tpu_custom_call.1} parent=1 // pred_fallthru
      _
    // Predicated region
    $region26: #{tpu_custom_call.1} parent=1 // pred_check
      _
    $region27: #{tpu_custom_call.1} parent=1 // pred_check_branch
      %59 = sbr.rel (0) target = $region29
    $region28: #{tpu_custom_call.1} parent=1 // pred_region
      _
    $region29: #{tpu_custom_call.1} parent=1 // pred_fallthru
      _
    // Predicated region
    $region30: #{tpu_custom_call.1} parent=1 // pred_check
      _
    $region31: #{tpu_custom_call.1} parent=1 // pred_check_branch
      %61 = sbr.rel (0) target = $region33
    $region32: #{tpu_custom_call.1} parent=1 // pred_region
      _
    $region33: #{tpu_custom_call.1} parent=1 // pred_fallthru
      _
    // Predicated region
    $region34: #{tpu_custom_call.1} parent=1 // pred_check
      _
    $region35: #{tpu_custom_call.1} parent=1 // pred_check_branch
      %63 = sbr.rel (0) target = $region37
    $region36: #{tpu_custom_call.1} parent=1 // pred_region
      _
    $region37: #{tpu_custom_call.1} parent=1 // pred_fallthru
      _
    // Predicated region
    $region38: #{tpu_custom_call.1} parent=1 // pred_check
      _
    $region39: #{tpu_custom_call.1} parent=1 // pred_check_branch
      %65 = sbr.rel (0) target = $region41
    $region40: #{tpu_custom_call.1} parent=1 // pred_region
      _
    $region41: #{tpu_custom_call.1} parent=1 // pred_fallthru
      _
    // Predicated region
    $region42: #{tpu_custom_call.1} parent=1 // pred_check
      _
    $region43: #{tpu_custom_call.1} parent=1 // pred_check_branch
      %67 = sbr.rel (0) target = $region45
    $region44: #{tpu_custom_call.1} parent=1 // pred_region
      %s69 = ssub.s32 2048, 2048
      %70 = vsyncadd [#allocation6], %s69
      %s71 = sshll.u32 [#allocation7], 4
      %s72 = int_to_ptr.vmem [resolvable:$true] %s71
      %77 = dma.hbm_to_vmem [thread:$0]  %s10, 2048, %s72, [#allocation6], 128, 128, 8
    $region45: #{tpu_custom_call.1} parent=1 // pred_fallthru
      _
    // Predicated region
    $region46: #{tpu_custom_call.1} parent=1 // pred_check
      _
    $region47: #{tpu_custom_call.1} parent=1 // pred_check_branch
      %79 = sbr.rel (0) target = $region49
    $region48: #{tpu_custom_call.1} parent=1 // pred_region
      _
    $region49: #{tpu_custom_call.1} parent=1 // pred_fallthru
      _
    // Predicated region
    $region50: #{tpu_custom_call.1} parent=1 // pred_check
      _
    $region51: #{tpu_custom_call.1} parent=1 // pred_check_branch
      %81 = sbr.rel (0) target = $region53
    $region52: #{tpu_custom_call.1} parent=1 // pred_region
      %s83 = ssub.s32 14336, 14336
      %84 = vsyncadd [#allocation9], %s83
      %s85 = sshll.u32 [#allocation8], 4
      %s86 = int_to_ptr.vmem [resolvable:$true] %s85
      %91 = dma.hbm_to_vmem [thread:$0]  %s12, 14336, %s86, [#allocation9], 448, 448, 28
    $region53: #{tpu_custom_call.1} parent=1 // pred_fallthru
      _
    // Predicated region
    $region54: #{tpu_custom_call.1} parent=1 // pred_check
      _
    $region55: #{tpu_custom_call.1} parent=1 // pred_check_branch
      %93 = sbr.rel (0) target = $region57
    $region56: #{tpu_custom_call.1} parent=1 // pred_region
      _
    $region57: #{tpu_custom_call.1} parent=1 // pred_fallthru
      _
    // Predicated region
    $region58: #{tpu_custom_call.1} parent=1 // pred_check
      _
    $region59: #{tpu_custom_call.1} parent=1 // pred_check_branch
      %95 = sbr.rel (0) target = $region61
    $region60: #{tpu_custom_call.1} parent=1 // pred_region
      %96 = dma.done [#allocation3], 14336
    $region61: #{tpu_custom_call.1} parent=1 // pred_fallthru
      _
    // Predicated region
    $region62: #{tpu_custom_call.1} parent=1 // pred_check
      _
    $region63: #{tpu_custom_call.1} parent=1 // pred_check_branch
      %98 = sbr.rel (0) target = $region65
    $region64: #{tpu_custom_call.1} parent=1 // pred_region
      %99 = dma.done [#allocation6], 2048
    $region65: #{tpu_custom_call.1} parent=1 // pred_fallthru
      _
    // Predicated region
    $region66: #{tpu_custom_call.1} parent=1 // pred_check
      _
    $region67: #{tpu_custom_call.1} parent=1 // pred_check_branch
      %101 = sbr.rel (0) target = $region69
    $region68: #{tpu_custom_call.1} parent=1 // pred_region
      %102 = dma.done [#allocation6], 2048
    $region69: #{tpu_custom_call.1} parent=1 // pred_fallthru
      _
    // Predicated region
    $region70: #{tpu_custom_call.1} parent=1 // pred_check
      _
    $region71: #{tpu_custom_call.1} parent=1 // pred_check_branch
      %104 = sbr.rel (0) target = $region73
    $region72: #{tpu_custom_call.1} parent=1 // pred_region
      %105 = dma.done [#allocation9], 14336
    $region73: #{tpu_custom_call.1} parent=1 // pred_fallthru
      _
    %v107 = vld [vmem:[%s0] sm:$0xff]
    %v108 = vld [vmem:[%s0 + $0x8] sm:$0xff]
    %v109 = vld [vmem:[%s0 + $0x10] sm:$0xff]
    %v110 = vld [vmem:[%s0 + $0x18] sm:$0xff]
    %v111 = vld [vmem:[%s0 + $0x20] sm:$0xff]
    %v112 = vld [vmem:[%s0 + $0x28] sm:$0xff]
    %v113 = vld [vmem:[%s0 + $0x30] sm:$0xff]
    %v114 = vpack.c.bf16 %v107, %v107
    %v115 = vpack.c.bf16 %v108, %v108
    %v116 = vpack.c.bf16 %v109, %v109
    %v117 = vpack.c.bf16 %v110, %v110
    %v118 = vpack.c.bf16 %v111, %v111
    %v119 = vpack.c.bf16 %v112, %v112
    %v120 = vpack.c.bf16 %v113, %v113
    %v121 = vld [vmem:[#allocation2] sm:$0xff]
    %v122 = vld [vmem:[#allocation2 + $0x8] sm:$0xff]
    %v123 = vld [vmem:[#allocation2 + $0x10] sm:$0xff]
    %v124 = vld [vmem:[#allocation2 + $0x18] sm:$0xff]
    %v125 = vld [vmem:[#allocation2 + $0x20] sm:$0xff]
    %v126 = vld [vmem:[#allocation2 + $0x28] sm:$0xff]
    %v127 = vld [vmem:[#allocation2 + $0x30] sm:$0xff]
    %v128 = vld [vmem:[#allocation2 + $0x38] sm:$0xff]
    %v129 = vld [vmem:[#allocation2 + $0x40] sm:$0xff]
    %v130 = vld [vmem:[#allocation2 + $0x48] sm:$0xff]
    %v131 = vld [vmem:[#allocation2 + $0x50] sm:$0xff]
    %v132 = vld [vmem:[#allocation2 + $0x58] sm:$0xff]
    %v133 = vld [vmem:[#allocation2 + $0x60] sm:$0xff]
    %v134 = vld [vmem:[#allocation2 + $0x68] sm:$0xff]
    %v135 = vld [vmem:[#allocation2 + $0x70] sm:$0xff]
    %v136 = vld [vmem:[#allocation2 + $0x78] sm:$0xff]
    %v137 = vld [vmem:[#allocation2 + $0x80] sm:$0xff]
    %v138 = vld [vmem:[#allocation2 + $0x88] sm:$0xff]
    %v139 = vld [vmem:[#allocation2 + $0x90] sm:$0xff]
    %v140 = vld [vmem:[#allocation2 + $0x98] sm:$0xff]
    %v141 = vld [vmem:[#allocation2 + $0xa0] sm:$0xff]
    %v142 = vld [vmem:[#allocation2 + $0xa8] sm:$0xff]
    %v143 = vld [vmem:[#allocation2 + $0xb0] sm:$0xff]
    %v144 = vld [vmem:[#allocation2 + $0xb8] sm:$0xff]
    %v145 = vld [vmem:[#allocation2 + $0xc0] sm:$0xff]
    %v146 = vld [vmem:[#allocation2 + $0xc8] sm:$0xff]
    %v147 = vld [vmem:[#allocation2 + $0xd0] sm:$0xff]
    %v148 = vld [vmem:[#allocation2 + $0xd8] sm:$0xff]
    %v149 = vld [vmem:[#allocation2 + $0xe0] sm:$0xff]
    %v150 = vld [vmem:[#allocation2 + $0xe8] sm:$0xff]
    %v151 = vld [vmem:[#allocation2 + $0xf0] sm:$0xff]
    %v152 = vld [vmem:[#allocation2 + $0xf8] sm:$0xff]
    %v153 = vld [vmem:[#allocation2 + $0x100] sm:$0xff]
    %v154 = vld [vmem:[#allocation2 + $0x108] sm:$0xff]
    %v155 = vld [vmem:[#allocation2 + $0x110] sm:$0xff]
    %v156 = vld [vmem:[#allocation2 + $0x118] sm:$0xff]
    %v157 = vld [vmem:[#allocation2 + $0x120] sm:$0xff]
    %v158 = vld [vmem:[#allocation2 + $0x128] sm:$0xff]
    %v159 = vld [vmem:[#allocation2 + $0x130] sm:$0xff]
    %v160 = vld [vmem:[#allocation2 + $0x138] sm:$0xff]
    %v161 = vld [vmem:[#allocation2 + $0x140] sm:$0xff]
    %v162 = vld [vmem:[#allocation2 + $0x148] sm:$0xff]
    %v163 = vld [vmem:[#allocation2 + $0x150] sm:$0xff]
    %v164 = vld [vmem:[#allocation2 + $0x158] sm:$0xff]
    %v165 = vld [vmem:[#allocation2 + $0x160] sm:$0xff]
    %v166 = vld [vmem:[#allocation2 + $0x168] sm:$0xff]
    %v167 = vld [vmem:[#allocation2 + $0x170] sm:$0xff]
    %v168 = vld [vmem:[#allocation2 + $0x178] sm:$0xff]
    %v169 = vld [vmem:[#allocation2 + $0x180] sm:$0xff]
    %v170 = vld [vmem:[#allocation2 + $0x188] sm:$0xff]
    %v171 = vld [vmem:[#allocation2 + $0x190] sm:$0xff]
    %v172 = vld [vmem:[#allocation2 + $0x198] sm:$0xff]
    %v173 = vld [vmem:[#allocation2 + $0x1a0] sm:$0xff]
    %v174 = vld [vmem:[#allocation2 + $0x1a8] sm:$0xff]
    %v175 = vld [vmem:[#allocation2 + $0x1b0] sm:$0xff]
    %v176 = vld [vmem:[#allocation2 + $0x1b8] sm:$0xff]
    %v177 = vld [vmem:[#allocation2 + $0x1c0] sm:$0xff]
    %v178 = vld [vmem:[#allocation2 + $0x1c8] sm:$0xff]
    %v179 = vld [vmem:[#allocation2 + $0x1d0] sm:$0xff]
    %v180 = vld [vmem:[#allocation2 + $0x1d8] sm:$0xff]
    %v181 = vld [vmem:[#allocation2 + $0x1e0] sm:$0xff]
    %v182 = vld [vmem:[#allocation2 + $0x1e8] sm:$0xff]
    %v183 = vld [vmem:[#allocation2 + $0x1f0] sm:$0xff]
    %v184 = vld [vmem:[#allocation2 + $0x1f8] sm:$0xff]
    %v185 = vld [vmem:[#allocation2 + $0x200] sm:$0xff]
    %v186 = vld [vmem:[#allocation2 + $0x208] sm:$0xff]
    %v187 = vld [vmem:[#allocation2 + $0x210] sm:$0xff]
    %v188 = vld [vmem:[#allocation2 + $0x218] sm:$0xff]
    %v189 = vld [vmem:[#allocation2 + $0x220] sm:$0xff]
    %v190 = vld [vmem:[#allocation2 + $0x228] sm:$0xff]
    %v191 = vld [vmem:[#allocation2 + $0x230] sm:$0xff]
    %v192 = vld [vmem:[#allocation2 + $0x238] sm:$0xff]
    %v193 = vld [vmem:[#allocation2 + $0x240] sm:$0xff]
    %v194 = vld [vmem:[#allocation2 + $0x248] sm:$0xff]
    %v195 = vld [vmem:[#allocation2 + $0x250] sm:$0xff]
    %v196 = vld [vmem:[#allocation2 + $0x258] sm:$0xff]
    %v197 = vld [vmem:[#allocation2 + $0x260] sm:$0xff]
    %v198 = vld [vmem:[#allocation2 + $0x268] sm:$0xff]
    %v199 = vld [vmem:[#allocation2 + $0x270] sm:$0xff]
    %v200 = vld [vmem:[#allocation2 + $0x278] sm:$0xff]
    %v201 = vld [vmem:[#allocation2 + $0x280] sm:$0xff]
    %v202 = vld [vmem:[#allocation2 + $0x288] sm:$0xff]
    %v203 = vld [vmem:[#allocation2 + $0x290] sm:$0xff]
    %v204 = vld [vmem:[#allocation2 + $0x298] sm:$0xff]
    %v205 = vld [vmem:[#allocation2 + $0x2a0] sm:$0xff]
    %v206 = vld [vmem:[#allocation2 + $0x2a8] sm:$0xff]
    %v207 = vld [vmem:[#allocation2 + $0x2b0] sm:$0xff]
    %v208 = vld [vmem:[#allocation2 + $0x2b8] sm:$0xff]
    %v209 = vld [vmem:[#allocation2 + $0x2c0] sm:$0xff]
    %v210 = vld [vmem:[#allocation2 + $0x2c8] sm:$0xff]
    %v211 = vld [vmem:[#allocation2 + $0x2d0] sm:$0xff]
    %v212 = vld [vmem:[#allocation2 + $0x2d8] sm:$0xff]
    %v213 = vld [vmem:[#allocation2 + $0x2e0] sm:$0xff]
    %v214 = vld [vmem:[#allocation2 + $0x2e8] sm:$0xff]
    %v215 = vld [vmem:[#allocation2 + $0x2f0] sm:$0xff]
    %v216 = vld [vmem:[#allocation2 + $0x2f8] sm:$0xff]
    %v217 = vld [vmem:[#allocation2 + $0x300] sm:$0xff]
    %v218 = vld [vmem:[#allocation2 + $0x308] sm:$0xff]
    %v219 = vld [vmem:[#allocation2 + $0x310] sm:$0xff]
    %v220 = vld [vmem:[#allocation2 + $0x318] sm:$0xff]
    %v221 = vld [vmem:[#allocation2 + $0x320] sm:$0xff]
    %v222 = vld [vmem:[#allocation2 + $0x328] sm:$0xff]
    %v223 = vld [vmem:[#allocation2 + $0x330] sm:$0xff]
    %v224 = vld [vmem:[#allocation2 + $0x338] sm:$0xff]
    %v225 = vld [vmem:[#allocation2 + $0x340] sm:$0xff]
    %v226 = vld [vmem:[#allocation2 + $0x348] sm:$0xff]
    %v227 = vld [vmem:[#allocation2 + $0x350] sm:$0xff]
    %v228 = vld [vmem:[#allocation2 + $0x358] sm:$0xff]
    %v229 = vld [vmem:[#allocation2 + $0x360] sm:$0xff]
    %v230 = vld [vmem:[#allocation2 + $0x368] sm:$0xff]
    %v231 = vld [vmem:[#allocation2 + $0x370] sm:$0xff]
    %v232 = vld [vmem:[#allocation2 + $0x378] sm:$0xff]
    %v233 = vld [vmem:[%s3] sm:$0x3]
    %v235 = vlaneseq
    %v236 = vshrl.u32 %v235, 7
    %v237 = vsub.s32 0, %v236
    %v238 = vrot.slane %v233, %v237
    %v239 = vlaneseq
    %v240 = vshrl.u32 %v239, 7
    %v241 = vsub.s32 1, %v240
    %v242 = vrot.slane %v233, %v241
    %v357 = vunpack.c.l.b16 %v121
    %v358 = vunpack.c.h.b16 %v121
    %v359 = vunpack.c.l.b16 %v122
    %v360 = vunpack.c.h.b16 %v122
    %v361 = vunpack.c.l.b16 %v123
    %v362 = vunpack.c.h.b16 %v123
    %v363 = vunpack.c.l.b16 %v124
    %v364 = vunpack.c.h.b16 %v124
    %v365 = vunpack.c.l.b16 %v125
    %v366 = vunpack.c.h.b16 %v125
    %v367 = vunpack.c.l.b16 %v126
    %v368 = vunpack.c.h.b16 %v126
    %v369 = vunpack.c.l.b16 %v127
    %v370 = vunpack.c.h.b16 %v127
    %v371 = vunpack.c.l.b16 %v128
    %v372 = vunpack.c.h.b16 %v128
    %v373 = vunpack.c.l.b16 %v129
    %v374 = vunpack.c.h.b16 %v129
    %v375 = vunpack.c.l.b16 %v130
    %v376 = vunpack.c.h.b16 %v130
    %v377 = vunpack.c.l.b16 %v131
    %v378 = vunpack.c.h.b16 %v131
    %v379 = vunpack.c.l.b16 %v132
    %v380 = vunpack.c.h.b16 %v132
    %v381 = vunpack.c.l.b16 %v133
    %v382 = vunpack.c.h.b16 %v133
    %v383 = vunpack.c.l.b16 %v134
    %v384 = vunpack.c.h.b16 %v134
    %v385 = vunpack.c.l.b16 %v135
    %v386 = vunpack.c.h.b16 %v135
    %v387 = vunpack.c.l.b16 %v136
    %v388 = vunpack.c.h.b16 %v136
    %v389 = vunpack.c.l.b16 %v137
    %v390 = vunpack.c.h.b16 %v137
    %v391 = vunpack.c.l.b16 %v138
    %v392 = vunpack.c.h.b16 %v138
    %v393 = vunpack.c.l.b16 %v139
    %v394 = vunpack.c.h.b16 %v139
    %v395 = vunpack.c.l.b16 %v140
    %v396 = vunpack.c.h.b16 %v140
    %v397 = vunpack.c.l.b16 %v141
    %v398 = vunpack.c.h.b16 %v141
    %v399 = vunpack.c.l.b16 %v142
    %v400 = vunpack.c.h.b16 %v142
    %v401 = vunpack.c.l.b16 %v143
    %v402 = vunpack.c.h.b16 %v143
    %v403 = vunpack.c.l.b16 %v144
    %v404 = vunpack.c.h.b16 %v144
    %v405 = vunpack.c.l.b16 %v145
    %v406 = vunpack.c.h.b16 %v145
    %v407 = vunpack.c.l.b16 %v146
    %v408 = vunpack.c.h.b16 %v146
    %v409 = vunpack.c.l.b16 %v147
    %v410 = vunpack.c.h.b16 %v147
    %v411 = vunpack.c.l.b16 %v148
    %v412 = vunpack.c.h.b16 %v148
    %v413 = vunpack.c.l.b16 %v149
    %v414 = vunpack.c.h.b16 %v149
    %v415 = vunpack.c.l.b16 %v150
    %v416 = vunpack.c.h.b16 %v150
    %v417 = vunpack.c.l.b16 %v151
    %v418 = vunpack.c.h.b16 %v151
    %v419 = vunpack.c.l.b16 %v152
    %v420 = vunpack.c.h.b16 %v152
    %v421 = vunpack.c.l.b16 %v153
    %v422 = vunpack.c.h.b16 %v153
    %v423 = vunpack.c.l.b16 %v154
    %v424 = vunpack.c.h.b16 %v154
    %v425 = vunpack.c.l.b16 %v155
    %v426 = vunpack.c.h.b16 %v155
    %v427 = vunpack.c.l.b16 %v156
    %v428 = vunpack.c.h.b16 %v156
    %v429 = vunpack.c.l.b16 %v157
    %v430 = vunpack.c.h.b16 %v157
    %v431 = vunpack.c.l.b16 %v158
    %v432 = vunpack.c.h.b16 %v158
    %v433 = vunpack.c.l.b16 %v159
    %v434 = vunpack.c.h.b16 %v159
    %v435 = vunpack.c.l.b16 %v160
    %v436 = vunpack.c.h.b16 %v160
    %v437 = vunpack.c.l.b16 %v161
    %v438 = vunpack.c.h.b16 %v161
    %v439 = vunpack.c.l.b16 %v162
    %v440 = vunpack.c.h.b16 %v162
    %v441 = vunpack.c.l.b16 %v163
    %v442 = vunpack.c.h.b16 %v163
    %v443 = vunpack.c.l.b16 %v164
    %v444 = vunpack.c.h.b16 %v164
    %v445 = vunpack.c.l.b16 %v165
    %v446 = vunpack.c.h.b16 %v165
    %v447 = vunpack.c.l.b16 %v166
    %v448 = vunpack.c.h.b16 %v166
    %v449 = vunpack.c.l.b16 %v167
    %v450 = vunpack.c.h.b16 %v167
    %v451 = vunpack.c.l.b16 %v168
    %v452 = vunpack.c.h.b16 %v168
    %v453 = vunpack.c.l.b16 %v169
    %v454 = vunpack.c.h.b16 %v169
    %v455 = vunpack.c.l.b16 %v170
    %v456 = vunpack.c.h.b16 %v170
    %v457 = vunpack.c.l.b16 %v171
    %v458 = vunpack.c.h.b16 %v171
    %v459 = vunpack.c.l.b16 %v172
    %v460 = vunpack.c.h.b16 %v172
    %v461 = vunpack.c.l.b16 %v173
    %v462 = vunpack.c.h.b16 %v173
    %v463 = vunpack.c.l.b16 %v174
    %v464 = vunpack.c.h.b16 %v174
    %v465 = vunpack.c.l.b16 %v175
    %v466 = vunpack.c.h.b16 %v175
    %v467 = vunpack.c.l.b16 %v176
    %v468 = vunpack.c.h.b16 %v176
    %v469 = vunpack.c.l.b16 %v177
    %v470 = vunpack.c.h.b16 %v177
    %v471 = vunpack.c.l.b16 %v178
    %v472 = vunpack.c.h.b16 %v178
    %v473 = vunpack.c.l.b16 %v179
    %v474 = vunpack.c.h.b16 %v179
    %v475 = vunpack.c.l.b16 %v180
    %v476 = vunpack.c.h.b16 %v180
    %v477 = vunpack.c.l.b16 %v181
    %v478 = vunpack.c.h.b16 %v181
    %v479 = vunpack.c.l.b16 %v182
    %v480 = vunpack.c.h.b16 %v182
    %v481 = vunpack.c.l.b16 %v183
    %v482 = vunpack.c.h.b16 %v183
    %v483 = vunpack.c.l.b16 %v184
    %v484 = vunpack.c.h.b16 %v184
    %v485 = vunpack.c.l.b16 %v185
    %v486 = vunpack.c.h.b16 %v185
    %v487 = vunpack.c.l.b16 %v186
    %v488 = vunpack.c.h.b16 %v186
    %v489 = vunpack.c.l.b16 %v187
    %v490 = vunpack.c.h.b16 %v187
    %v491 = vunpack.c.l.b16 %v188
    %v492 = vunpack.c.h.b16 %v188
    %v493 = vunpack.c.l.b16 %v189
    %v494 = vunpack.c.h.b16 %v189
    %v495 = vunpack.c.l.b16 %v190
    %v496 = vunpack.c.h.b16 %v190
    %v497 = vunpack.c.l.b16 %v191
    %v498 = vunpack.c.h.b16 %v191
    %v499 = vunpack.c.l.b16 %v192
    %v500 = vunpack.c.h.b16 %v192
    %v501 = vunpack.c.l.b16 %v193
    %v502 = vunpack.c.h.b16 %v193
    %v503 = vunpack.c.l.b16 %v194
    %v504 = vunpack.c.h.b16 %v194
    %v505 = vunpack.c.l.b16 %v195
    %v506 = vunpack.c.h.b16 %v195
    %v507 = vunpack.c.l.b16 %v196
    %v508 = vunpack.c.h.b16 %v196
    %v509 = vunpack.c.l.b16 %v197
    %v510 = vunpack.c.h.b16 %v197
    %v511 = vunpack.c.l.b16 %v198
    %v512 = vunpack.c.h.b16 %v198
    %v513 = vunpack.c.l.b16 %v199
    %v514 = vunpack.c.h.b16 %v199
    %v515 = vunpack.c.l.b16 %v200
    %v516 = vunpack.c.h.b16 %v200
    %v517 = vunpack.c.l.b16 %v201
    %v518 = vunpack.c.h.b16 %v201
    %v519 = vunpack.c.l.b16 %v202
    %v520 = vunpack.c.h.b16 %v202
    %v521 = vunpack.c.l.b16 %v203
    %v522 = vunpack.c.h.b16 %v203
    %v523 = vunpack.c.l.b16 %v204
    %v524 = vunpack.c.h.b16 %v204
    %v525 = vunpack.c.l.b16 %v205
    %v526 = vunpack.c.h.b16 %v205
    %v527 = vunpack.c.l.b16 %v206
    %v528 = vunpack.c.h.b16 %v206
    %v529 = vunpack.c.l.b16 %v207
    %v530 = vunpack.c.h.b16 %v207
    %v531 = vunpack.c.l.b16 %v208
    %v532 = vunpack.c.h.b16 %v208
    %v533 = vunpack.c.l.b16 %v209
    %v534 = vunpack.c.h.b16 %v209
    %v535 = vunpack.c.l.b16 %v210
    %v536 = vunpack.c.h.b16 %v210
    %v537 = vunpack.c.l.b16 %v211
    %v538 = vunpack.c.h.b16 %v211
    %v539 = vunpack.c.l.b16 %v212
    %v540 = vunpack.c.h.b16 %v212
    %v541 = vunpack.c.l.b16 %v213
    %v542 = vunpack.c.h.b16 %v213
    %v543 = vunpack.c.l.b16 %v214
    %v544 = vunpack.c.h.b16 %v214
    %v545 = vunpack.c.l.b16 %v215
    %v546 = vunpack.c.h.b16 %v215
    %v547 = vunpack.c.l.b16 %v216
    %v548 = vunpack.c.h.b16 %v216
    %v549 = vunpack.c.l.b16 %v217
    %v550 = vunpack.c.h.b16 %v217
    %v551 = vunpack.c.l.b16 %v218
    %v552 = vunpack.c.h.b16 %v218
    %v553 = vunpack.c.l.b16 %v219
    %v554 = vunpack.c.h.b16 %v219
    %v555 = vunpack.c.l.b16 %v220
    %v556 = vunpack.c.h.b16 %v220
    %v557 = vunpack.c.l.b16 %v221
    %v558 = vunpack.c.h.b16 %v221
    %v559 = vunpack.c.l.b16 %v222
    %v560 = vunpack.c.h.b16 %v222
    %v561 = vunpack.c.l.b16 %v223
    %v562 = vunpack.c.h.b16 %v223
    %v563 = vunpack.c.l.b16 %v224
    %v564 = vunpack.c.h.b16 %v224
    %v565 = vunpack.c.l.b16 %v225
    %v566 = vunpack.c.h.b16 %v225
    %v567 = vunpack.c.l.b16 %v226
    %v568 = vunpack.c.h.b16 %v226
    %v569 = vunpack.c.l.b16 %v227
    %v570 = vunpack.c.h.b16 %v227
    %v571 = vunpack.c.l.b16 %v228
    %v572 = vunpack.c.h.b16 %v228
    %v573 = vunpack.c.l.b16 %v229
    %v574 = vunpack.c.h.b16 %v229
    %v575 = vunpack.c.l.b16 %v230
    %v576 = vunpack.c.h.b16 %v230
    %v577 = vunpack.c.l.b16 %v231
    %v578 = vunpack.c.h.b16 %v231
    %v579 = vunpack.c.l.b16 %v232
    %v580 = vunpack.c.h.b16 %v232
    %v581 = vpack.c.b16 %v359, %v357
    %v582 = vpack.c.b16 %v360, %v358
    %v583 = vpack.c.b16 %v363, %v361
    %v584 = vpack.c.b16 %v364, %v362
    %v585 = vpack.c.b16 %v367, %v365
    %v586 = vpack.c.b16 %v368, %v366
    %v587 = vpack.c.b16 %v371, %v369
    %v588 = vpack.c.b16 %v372, %v370
    %v589 = vpack.c.b16 %v375, %v373
    %v590 = vpack.c.b16 %v376, %v374
    %v591 = vpack.c.b16 %v379, %v377
    %v592 = vpack.c.b16 %v380, %v378
    %v593 = vpack.c.b16 %v383, %v381
    %v594 = vpack.c.b16 %v384, %v382
    %v595 = vpack.c.b16 %v387, %v385
    %v596 = vpack.c.b16 %v388, %v386
    %v597 = vpack.c.b16 %v391, %v389
    %v598 = vpack.c.b16 %v392, %v390
    %v599 = vpack.c.b16 %v395, %v393
    %v600 = vpack.c.b16 %v396, %v394
    %v601 = vpack.c.b16 %v399, %v397
    %v602 = vpack.c.b16 %v400, %v398
    %v603 = vpack.c.b16 %v403, %v401
    %v604 = vpack.c.b16 %v404, %v402
    %v605 = vpack.c.b16 %v407, %v405
    %v606 = vpack.c.b16 %v408, %v406
    %v607 = vpack.c.b16 %v411, %v409
    %v608 = vpack.c.b16 %v412, %v410
    %v609 = vpack.c.b16 %v415, %v413
    %v610 = vpack.c.b16 %v416, %v414
    %v611 = vpack.c.b16 %v419, %v417
    %v612 = vpack.c.b16 %v420, %v418
    %v613 = vpack.c.b16 %v423, %v421
    %v614 = vpack.c.b16 %v424, %v422
    %v615 = vpack.c.b16 %v427, %v425
    %v616 = vpack.c.b16 %v428, %v426
    %v617 = vpack.c.b16 %v431, %v429
    %v618 = vpack.c.b16 %v432, %v430
    %v619 = vpack.c.b16 %v435, %v433
    %v620 = vpack.c.b16 %v436, %v434
    %v621 = vpack.c.b16 %v439, %v437
    %v622 = vpack.c.b16 %v440, %v438
    %v623 = vpack.c.b16 %v443, %v441
    %v624 = vpack.c.b16 %v444, %v442
    %v625 = vpack.c.b16 %v447, %v445
    %v626 = vpack.c.b16 %v448, %v446
    %v627 = vpack.c.b16 %v451, %v449
    %v628 = vpack.c.b16 %v452, %v450
    %v629 = vpack.c.b16 %v455, %v453
    %v630 = vpack.c.b16 %v456, %v454
    %v631 = vpack.c.b16 %v459, %v457
    %v632 = vpack.c.b16 %v460, %v458
    %v633 = vpack.c.b16 %v463, %v461
    %v634 = vpack.c.b16 %v464, %v462
    %v635 = vpack.c.b16 %v467, %v465
    %v636 = vpack.c.b16 %v468, %v466
    %v637 = vpack.c.b16 %v471, %v469
    %v638 = vpack.c.b16 %v472, %v470
    %v639 = vpack.c.b16 %v475, %v473
    %v640 = vpack.c.b16 %v476, %v474
    %v641 = vpack.c.b16 %v479, %v477
    %v642 = vpack.c.b16 %v480, %v478
    %v643 = vpack.c.b16 %v483, %v481
    %v644 = vpack.c.b16 %v484, %v482
    %v645 = vpack.c.b16 %v487, %v485
    %v646 = vpack.c.b16 %v488, %v486
    %v647 = vpack.c.b16 %v491, %v489
    %v648 = vpack.c.b16 %v492, %v490
    %v649 = vpack.c.b16 %v495, %v493
    %v650 = vpack.c.b16 %v496, %v494
    %v651 = vpack.c.b16 %v499, %v497
    %v652 = vpack.c.b16 %v500, %v498
    %v653 = vpack.c.b16 %v503, %v501
    %v654 = vpack.c.b16 %v504, %v502
    %v655 = vpack.c.b16 %v507, %v505
    %v656 = vpack.c.b16 %v508, %v506
    %v657 = vpack.c.b16 %v511, %v509
    %v658 = vpack.c.b16 %v512, %v510
    %v659 = vpack.c.b16 %v515, %v513
    %v660 = vpack.c.b16 %v516, %v514
    %v661 = vpack.c.b16 %v519, %v517
    %v662 = vpack.c.b16 %v520, %v518
    %v663 = vpack.c.b16 %v523, %v521
    %v664 = vpack.c.b16 %v524, %v522
    %v665 = vpack.c.b16 %v527, %v525
    %v666 = vpack.c.b16 %v528, %v526
    %v667 = vpack.c.b16 %v531, %v529
    %v668 = vpack.c.b16 %v532, %v530
    %v669 = vpack.c.b16 %v535, %v533
    %v670 = vpack.c.b16 %v536, %v534
    %v671 = vpack.c.b16 %v539, %v537
    %v672 = vpack.c.b16 %v540, %v538
    %v673 = vpack.c.b16 %v543, %v541
    %v674 = vpack.c.b16 %v544, %v542
    %v675 = vpack.c.b16 %v547, %v545
    %v676 = vpack.c.b16 %v548, %v546
    %v677 = vpack.c.b16 %v551, %v549
    %v678 = vpack.c.b16 %v552, %v550
    %v679 = vpack.c.b16 %v555, %v553
    %v680 = vpack.c.b16 %v556, %v554
    %v681 = vpack.c.b16 %v559, %v557
    %v682 = vpack.c.b16 %v560, %v558
    %v683 = vpack.c.b16 %v563, %v561
    %v684 = vpack.c.b16 %v564, %v562
    %v685 = vpack.c.b16 %v567, %v565
    %v686 = vpack.c.b16 %v568, %v566
    %v687 = vpack.c.b16 %v571, %v569
    %v688 = vpack.c.b16 %v572, %v570
    %v689 = vpack.c.b16 %v575, %v573
    %v690 = vpack.c.b16 %v576, %v574
    %v691 = vpack.c.b16 %v579, %v577
    %v692 = vpack.c.b16 %v580, %v578
    %805 = vmatprep.subr.bf16.mxu0 %v582
    %806 = vmatpush1.bf16.msra.mxu0 %v581
    %807 = vmatprep.subr.bf16.mxu0 %v584
    %808 = vmatpush1.bf16.msra.mxu0 %v583
    %809 = vmatprep.subr.bf16.mxu0 %v586
    %810 = vmatpush1.bf16.msra.mxu0 %v585
    %811 = vmatprep.subr.bf16.mxu0 %v588
    %812 = vmatpush1.bf16.msra.mxu0 %v587
    %813 = vmatprep.subr.bf16.mxu0 %v590
    %814 = vmatpush1.bf16.msra.mxu0 %v589
    %815 = vmatprep.subr.bf16.mxu0 %v592
    %816 = vmatpush1.bf16.msra.mxu0 %v591
    %817 = vmatprep.subr.bf16.mxu0 %v594
    %818 = vmatpush1.bf16.msra.mxu0 %v593
    %819 = vmatprep.subr.bf16.mxu0 %v596
    %820 = vmatpush1.bf16.msra.mxu0 %v595
    %821 = vmatprep.subr.bf16.mxu0 %v598
    %822 = vmatpush1.bf16.msra.mxu0 %v597
    %823 = vmatprep.subr.bf16.mxu0 %v600
    %824 = vmatpush1.bf16.msra.mxu0 %v599
    %825 = vmatprep.subr.bf16.mxu0 %v602
    %826 = vmatpush1.bf16.msra.mxu0 %v601
    %827 = vmatprep.subr.bf16.mxu0 %v604
    %828 = vmatpush1.bf16.msra.mxu0 %v603
    %829 = vmatprep.subr.bf16.mxu0 %v606
    %830 = vmatpush1.bf16.msra.mxu0 %v605
    %831 = vmatprep.subr.bf16.mxu0 %v608
    %832 = vmatpush1.bf16.msra.mxu0 %v607
    %833 = vmatprep.subr.bf16.mxu0 %v610
    %834 = vmatpush1.bf16.msra.mxu0 %v609
    %835 = vmatprep.subr.bf16.mxu0 %v612
    %836 = vmatpush1.bf16.msra.mxu0 %v611
    %837 = vmatprep.mubr.bf16.mxu0 %v115
    %838 = vmatmul.mubr.bf16.gmra.mrb[0].mxu0 %v114
    %v839 = vpop.f32.mrb[0].mxu0
    %v840 = vadd.f32 %v238, %v839
    %v841 = vpop.f32.mrb[0].mxu0
    %v842 = vadd.f32 %v242, %v841
    %v843 = vpop.f32.mrb[0].mxu0
    %v844 = vpop.f32.mrb[0].mxu0
    %845 = vdwg.mxu0
    %846 = vmatprep.subr.bf16.mxu0 %v614
    %847 = vmatpush1.bf16.msra.mxu0 %v613
    %848 = vmatprep.subr.bf16.mxu0 %v616
    %849 = vmatpush1.bf16.msra.mxu0 %v615
    %850 = vmatprep.subr.bf16.mxu0 %v618
    %851 = vmatpush1.bf16.msra.mxu0 %v617
    %852 = vmatprep.subr.bf16.mxu0 %v620
    %853 = vmatpush1.bf16.msra.mxu0 %v619
    %854 = vmatprep.subr.bf16.mxu0 %v622
    %855 = vmatpush1.bf16.msra.mxu0 %v621
    %856 = vmatprep.subr.bf16.mxu0 %v624
    %857 = vmatpush1.bf16.msra.mxu0 %v623
    %858 = vmatprep.subr.bf16.mxu0 %v626
    %859 = vmatpush1.bf16.msra.mxu0 %v625
    %860 = vmatprep.subr.bf16.mxu0 %v628
    %861 = vmatpush1.bf16.msra.mxu0 %v627
    %862 = vmatprep.subr.bf16.mxu0 %v630
    %863 = vmatpush1.bf16.msra.mxu0 %v629
    %864 = vmatprep.subr.bf16.mxu0 %v632
    %865 = vmatpush1.bf16.msra.mxu0 %v631
    %866 = vmatprep.subr.bf16.mxu0 %v634
    %867 = vmatpush1.bf16.msra.mxu0 %v633
    %868 = vmatprep.subr.bf16.mxu0 %v636
    %869 = vmatpush1.bf16.msra.mxu0 %v635
    %870 = vmatprep.subr.bf16.mxu0 %v638
    %871 = vmatpush1.bf16.msra.mxu0 %v637
    %872 = vmatprep.subr.bf16.mxu0 %v640
    %873 = vmatpush1.bf16.msra.mxu0 %v639
    %874 = vmatprep.subr.bf16.mxu0 %v642
    %875 = vmatpush1.bf16.msra.mxu0 %v641
    %876 = vmatprep.subr.bf16.mxu0 %v644
    %877 = vmatpush1.bf16.msra.mxu0 %v643
    %878 = vmatprep.mubr.bf16.mxu0 %v117
    %879 = vmatmul.mubr.bf16.gmra.mrb[0].mxu0 %v116
    %v880 = vpop.f32.mrb[0].mxu0
    %v881 = vadd.f32 %v840, %v880
    %v882 = vpop.f32.mrb[0].mxu0
    %v883 = vadd.f32 %v842, %v882
    %v884 = vpop.f32.mrb[0].mxu0
    %v885 = vpop.f32.mrb[0].mxu0
    %886 = vdwg.mxu0
    %887 = vmatprep.subr.bf16.mxu0 %v646
    %888 = vmatpush1.bf16.msra.mxu0 %v645
    %889 = vmatprep.subr.bf16.mxu0 %v648
    %890 = vmatpush1.bf16.msra.mxu0 %v647
    %891 = vmatprep.subr.bf16.mxu0 %v650
    %892 = vmatpush1.bf16.msra.mxu0 %v649
    %893 = vmatprep.subr.bf16.mxu0 %v652
    %894 = vmatpush1.bf16.msra.mxu0 %v651
    %895 = vmatprep.subr.bf16.mxu0 %v654
    %896 = vmatpush1.bf16.msra.mxu0 %v653
    %897 = vmatprep.subr.bf16.mxu0 %v656
    %898 = vmatpush1.bf16.msra.mxu0 %v655
    %899 = vmatprep.subr.bf16.mxu0 %v658
    %900 = vmatpush1.bf16.msra.mxu0 %v657
    %901 = vmatprep.subr.bf16.mxu0 %v660
    %902 = vmatpush1.bf16.msra.mxu0 %v659
    %903 = vmatprep.subr.bf16.mxu0 %v662
    %904 = vmatpush1.bf16.msra.mxu0 %v661
    %905 = vmatprep.subr.bf16.mxu0 %v664
    %906 = vmatpush1.bf16.msra.mxu0 %v663
    %907 = vmatprep.subr.bf16.mxu0 %v666
    %908 = vmatpush1.bf16.msra.mxu0 %v665
    %909 = vmatprep.subr.bf16.mxu0 %v668
    %910 = vmatpush1.bf16.msra.mxu0 %v667
    %911 = vmatprep.subr.bf16.mxu0 %v670
    %912 = vmatpush1.bf16.msra.mxu0 %v669
    %913 = vmatprep.subr.bf16.mxu0 %v672
    %914 = vmatpush1.bf16.msra.mxu0 %v671
    %915 = vmatprep.subr.bf16.mxu0 %v674
    %916 = vmatpush1.bf16.msra.mxu0 %v673
    %917 = vmatprep.subr.bf16.mxu0 %v676
    %918 = vmatpush1.bf16.msra.mxu0 %v675
    %919 = vmatprep.mubr.bf16.mxu0 %v119
    %920 = vmatmul.mubr.bf16.gmra.mrb[0].mxu0 %v118
    %v921 = vpop.f32.mrb[0].mxu0
    %v922 = vadd.f32 %v881, %v921
    %v923 = vpop.f32.mrb[0].mxu0
    %v924 = vadd.f32 %v883, %v923
    %v925 = vpop.f32.mrb[0].mxu0
    %v926 = vpop.f32.mrb[0].mxu0
    %927 = vdwg.mxu0
    %928 = vmatprep.subr.bf16.mxu0 %v678
    %929 = vmatpush1.bf16.msra.mxu0 %v677
    %930 = vmatprep.subr.bf16.mxu0 %v680
    %931 = vmatpush1.bf16.msra.mxu0 %v679
    %932 = vmatprep.subr.bf16.mxu0 %v682
    %933 = vmatpush1.bf16.msra.mxu0 %v681
    %934 = vmatprep.subr.bf16.mxu0 %v684
    %935 = vmatpush1.bf16.msra.mxu0 %v683
    %936 = vmatprep.subr.bf16.mxu0 %v686
    %937 = vmatpush1.bf16.msra.mxu0 %v685
    %938 = vmatprep.subr.bf16.mxu0 %v688
    %939 = vmatpush1.bf16.msra.mxu0 %v687
    %940 = vmatprep.subr.bf16.mxu0 %v690
    %941 = vmatpush1.bf16.msra.mxu0 %v689
    %942 = vmatprep.subr.bf16.mxu0 %v692
    %943 = vmatpush1.bf16.msra.mxu0 %v691
    %944 = vmatprep.subr.bf16.mxu0 0
    %945 = vmatpush1.bf16.msra.mxu0 0
    %946 = vmatprep.subr.bf16.mxu0 0
    %947 = vmatpush1.bf16.msra.mxu0 0
    %948 = vmatprep.subr.bf16.mxu0 0
    %949 = vmatpush1.bf16.msra.mxu0 0
    %950 = vmatprep.subr.bf16.mxu0 0
    %951 = vmatpush1.bf16.msra.mxu0 0
    %952 = vmatprep.subr.bf16.mxu0 0
    %953 = vmatpush1.bf16.msra.mxu0 0
    %954 = vmatprep.subr.bf16.mxu0 0
    %955 = vmatpush1.bf16.msra.mxu0 0
    %956 = vmatprep.subr.bf16.mxu0 0
    %957 = vmatpush1.bf16.msra.mxu0 0
    %958 = vmatprep.subr.bf16.mxu0 0
    %959 = vmatpush1.bf16.msra.mxu0 0
    %960 = vmatprep.mubr.bf16.mxu0 0
    %961 = vmatmul.mubr.bf16.gmra.mrb[0].mxu0 %v120
    %v962 = vpop.f32.mrb[0].mxu0
    %v963 = vadd.f32 %v922, %v962
    %v964 = vpop.f32.mrb[0].mxu0
    %v965 = vadd.f32 %v924, %v964
    %v966 = vpop.f32.mrb[0].mxu0
    %v967 = vpop.f32.mrb[0].mxu0
    %968 = vdwg.mxu0
    %v969 = vmax.f32 %v963, 0.0
    %v970 = vmax.f32 %v965, 0.0
    %v971 = vpack.c.bf16 %v969, %v969
    %v972 = vpack.c.bf16 %v970, %v970
    %v973 = vld [vmem:[#allocation5] sm:$0xf]
    %v974 = vld [vmem:[#allocation5 + $0x4] sm:$0xf]
    %v975 = vld [vmem:[#allocation5 + $0x8] sm:$0xf]
    %v976 = vld [vmem:[#allocation5 + $0xc] sm:$0xf]
    %v977 = vld [vmem:[#allocation5 + $0x10] sm:$0xf]
    %v978 = vld [vmem:[#allocation5 + $0x14] sm:$0xf]
    %v979 = vld [vmem:[#allocation5 + $0x18] sm:$0xf]
    %v980 = vld [vmem:[#allocation5 + $0x1c] sm:$0xf]
    %v981 = vld [vmem:[#allocation5 + $0x20] sm:$0xf]
    %v982 = vld [vmem:[#allocation5 + $0x24] sm:$0xf]
    %v983 = vld [vmem:[#allocation5 + $0x28] sm:$0xf]
    %v984 = vld [vmem:[#allocation5 + $0x2c] sm:$0xf]
    %v985 = vld [vmem:[#allocation5 + $0x30] sm:$0xf]
    %v986 = vld [vmem:[#allocation5 + $0x34] sm:$0xf]
    %v987 = vld [vmem:[#allocation5 + $0x38] sm:$0xf]
    %v988 = vld [vmem:[#allocation5 + $0x3c] sm:$0xf]
    %v989 = vld [vmem:[#allocation5 + $0x40] sm:$0xf]
    %v990 = vld [vmem:[#allocation5 + $0x44] sm:$0xf]
    %v991 = vld [vmem:[#allocation5 + $0x48] sm:$0xf]
    %v992 = vld [vmem:[#allocation5 + $0x4c] sm:$0xf]
    %v993 = vld [vmem:[#allocation5 + $0x50] sm:$0xf]
    %v994 = vld [vmem:[#allocation5 + $0x54] sm:$0xf]
    %v995 = vld [vmem:[#allocation5 + $0x58] sm:$0xf]
    %v996 = vld [vmem:[#allocation5 + $0x5c] sm:$0xf]
    %v997 = vld [vmem:[#allocation5 + $0x60] sm:$0xf]
    %v998 = vld [vmem:[#allocation5 + $0x64] sm:$0xf]
    %v999 = vld [vmem:[#allocation5 + $0x68] sm:$0xf]
    %v1000 = vld [vmem:[#allocation5 + $0x6c] sm:$0xf]
    %v1001 = vld [vmem:[#allocation5 + $0x70] sm:$0xf]
    %v1002 = vld [vmem:[#allocation5 + $0x74] sm:$0xf]
    %v1003 = vld [vmem:[#allocation5 + $0x78] sm:$0xf]
    %v1004 = vld [vmem:[#allocation5 + $0x7c] sm:$0xf]
    %v1005 = vld [vmem:[%s5] sm:$0x1]
    %v1007 = vlaneseq
    %v1008 = vshrl.u32 %v1007, 7
    %v1009 = vsub.s32 0, %v1008
    %v1010 = vrot.slane %v1005, %v1009
    %v1044 = vunpack.c.l.b16 %v973
    %v1045 = vunpack.c.l.b16 %v974
    %v1046 = vunpack.c.l.b16 %v975
    %v1047 = vunpack.c.l.b16 %v976
    %v1048 = vunpack.c.l.b16 %v977
    %v1049 = vunpack.c.l.b16 %v978
    %v1050 = vunpack.c.l.b16 %v979
    %v1051 = vunpack.c.l.b16 %v980
    %v1052 = vunpack.c.l.b16 %v981
    %v1053 = vunpack.c.l.b16 %v982
    %v1054 = vunpack.c.l.b16 %v983
    %v1055 = vunpack.c.l.b16 %v984
    %v1056 = vunpack.c.l.b16 %v985
    %v1057 = vunpack.c.l.b16 %v986
    %v1058 = vunpack.c.l.b16 %v987
    %v1059 = vunpack.c.l.b16 %v988
    %v1060 = vunpack.c.l.b16 %v989
    %v1061 = vunpack.c.l.b16 %v990
    %v1062 = vunpack.c.l.b16 %v991
    %v1063 = vunpack.c.l.b16 %v992
    %v1064 = vunpack.c.l.b16 %v993
    %v1065 = vunpack.c.l.b16 %v994
    %v1066 = vunpack.c.l.b16 %v995
    %v1067 = vunpack.c.l.b16 %v996
    %v1068 = vunpack.c.l.b16 %v997
    %v1069 = vunpack.c.l.b16 %v998
    %v1070 = vunpack.c.l.b16 %v999
    %v1071 = vunpack.c.l.b16 %v1000
    %v1072 = vunpack.c.l.b16 %v1001
    %v1073 = vunpack.c.l.b16 %v1002
    %v1074 = vunpack.c.l.b16 %v1003
    %v1075 = vunpack.c.l.b16 %v1004
    %v1076 = vpack.c.b16 %v1045, %v1044
    %v1077 = vpack.c.b16 %v1047, %v1046
    %v1078 = vpack.c.b16 %v1049, %v1048
    %v1079 = vpack.c.b16 %v1051, %v1050
    %v1080 = vpack.c.b16 %v1053, %v1052
    %v1081 = vpack.c.b16 %v1055, %v1054
    %v1082 = vpack.c.b16 %v1057, %v1056
    %v1083 = vpack.c.b16 %v1059, %v1058
    %v1084 = vpack.c.b16 %v1061, %v1060
    %v1085 = vpack.c.b16 %v1063, %v1062
    %v1086 = vpack.c.b16 %v1065, %v1064
    %v1087 = vpack.c.b16 %v1067, %v1066
    %v1088 = vpack.c.b16 %v1069, %v1068
    %v1089 = vpack.c.b16 %v1071, %v1070
    %v1090 = vpack.c.b16 %v1073, %v1072
    %v1091 = vpack.c.b16 %v1075, %v1074
    %1108 = vmatprep.subr.bf16.mxu0 0
    %1109 = vmatpush1.bf16.msra.mxu0 %v1076
    %1110 = vmatprep.subr.bf16.mxu0 0
    %1111 = vmatpush1.bf16.msra.mxu0 %v1077
    %1112 = vmatprep.subr.bf16.mxu0 0
    %1113 = vmatpush1.bf16.msra.mxu0 %v1078
    %1114 = vmatprep.subr.bf16.mxu0 0
    %1115 = vmatpush1.bf16.msra.mxu0 %v1079
    %1116 = vmatprep.subr.bf16.mxu0 0
    %1117 = vmatpush1.bf16.msra.mxu0 %v1080
    %1118 = vmatprep.subr.bf16.mxu0 0
    %1119 = vmatpush1.bf16.msra.mxu0 %v1081
    %1120 = vmatprep.subr.bf16.mxu0 0
    %1121 = vmatpush1.bf16.msra.mxu0 %v1082
    %1122 = vmatprep.subr.bf16.mxu0 0
    %1123 = vmatpush1.bf16.msra.mxu0 %v1083
    %1124 = vmatprep.subr.bf16.mxu0 0
    %1125 = vmatpush1.bf16.msra.mxu0 %v1084
    %1126 = vmatprep.subr.bf16.mxu0 0
    %1127 = vmatpush1.bf16.msra.mxu0 %v1085
    %1128 = vmatprep.subr.bf16.mxu0 0
    %1129 = vmatpush1.bf16.msra.mxu0 %v1086
    %1130 = vmatprep.subr.bf16.mxu0 0
    %1131 = vmatpush1.bf16.msra.mxu0 %v1087
    %1132 = vmatprep.subr.bf16.mxu0 0
    %1133 = vmatpush1.bf16.msra.mxu0 %v1088
    %1134 = vmatprep.subr.bf16.mxu0 0
    %1135 = vmatpush1.bf16.msra.mxu0 %v1089
    %1136 = vmatprep.subr.bf16.mxu0 0
    %1137 = vmatpush1.bf16.msra.mxu0 %v1090
    %1138 = vmatprep.subr.bf16.mxu0 0
    %1139 = vmatpush1.bf16.msra.mxu0 %v1091
    %1140 = vmatprep.mubr.bf16.mxu0 %v972
    %1141 = vmatmul.mubr.bf16.gmra.mrb[0].mxu0 %v971
    %v1142 = vpop.f32.mrb[0].mxu0
    %v1143 = vadd.f32 %v1010, %v1142
    %v1144 = vpop.f32.mrb[0].mxu0
    %v1145 = vpop.f32.mrb[0].mxu0
    %v1146 = vpop.f32.mrb[0].mxu0
    %1147 = vdwg.mxu0
    %v1148 = vmax.f32 %v1143, 0.0
    %v1149 = vpack.c.bf16 %v1148, %v1148
    %v1150 = vld [vmem:[%s6] sm:$0xf]
    %v1151 = vld [vmem:[%s6 + $0x4] sm:$0xf]
    %v1152 = vld [vmem:[%s6 + $0x8] sm:$0xf]
    %v1153 = vld [vmem:[%s6 + $0xc] sm:$0xf]
    %v1154 = vld [vmem:[%s6 + $0x10] sm:$0xf]
    %v1155 = vld [vmem:[%s6 + $0x14] sm:$0xf]
    %v1156 = vld [vmem:[%s6 + $0x18] sm:$0xf]
    %v1157 = vld [vmem:[%s6 + $0x1c] sm:$0xf]
    %v1158 = vld [vmem:[%s6 + $0x20] sm:$0xf]
    %v1159 = vld [vmem:[%s6 + $0x24] sm:$0xf]
    %v1160 = vld [vmem:[%s6 + $0x28] sm:$0xf]
    %v1161 = vld [vmem:[%s6 + $0x2c] sm:$0xf]
    %v1162 = vld [vmem:[%s6 + $0x30] sm:$0xf]
    %v1163 = vld [vmem:[%s6 + $0x34] sm:$0xf]
    %v1164 = vld [vmem:[%s6 + $0x38] sm:$0xf]
    %v1165 = vld [vmem:[%s6 + $0x3c] sm:$0xf]
    %v1166 = vld [vmem:[%s7] sm:$0x1]
    %v1168 = vlaneseq
    %v1169 = vshrl.u32 %v1168, 7
    %v1170 = vsub.s32 0, %v1169
    %v1171 = vrot.slane %v1166, %v1170
    %v1189 = vunpack.c.l.b16 %v1150
    %v1190 = vunpack.c.l.b16 %v1151
    %v1191 = vunpack.c.l.b16 %v1152
    %v1192 = vunpack.c.l.b16 %v1153
    %v1193 = vunpack.c.l.b16 %v1154
    %v1194 = vunpack.c.l.b16 %v1155
    %v1195 = vunpack.c.l.b16 %v1156
    %v1196 = vunpack.c.l.b16 %v1157
    %v1197 = vunpack.c.l.b16 %v1158
    %v1198 = vunpack.c.l.b16 %v1159
    %v1199 = vunpack.c.l.b16 %v1160
    %v1200 = vunpack.c.l.b16 %v1161
    %v1201 = vunpack.c.l.b16 %v1162
    %v1202 = vunpack.c.l.b16 %v1163
    %v1203 = vunpack.c.l.b16 %v1164
    %v1204 = vunpack.c.l.b16 %v1165
    %v1205 = vpack.c.b16 %v1190, %v1189
    %v1206 = vpack.c.b16 %v1192, %v1191
    %v1207 = vpack.c.b16 %v1194, %v1193
    %v1208 = vpack.c.b16 %v1196, %v1195
    %v1209 = vpack.c.b16 %v1198, %v1197
    %v1210 = vpack.c.b16 %v1200, %v1199
    %v1211 = vpack.c.b16 %v1202, %v1201
    %v1212 = vpack.c.b16 %v1204, %v1203
    %1221 = vmatprep.subr.bf16.mxu0 0
    %1222 = vmatpush1.bf16.msra.mxu0 %v1205
    %1223 = vmatprep.subr.bf16.mxu0 0
    %1224 = vmatpush1.bf16.msra.mxu0 %v1206
    %1225 = vmatprep.subr.bf16.mxu0 0
    %1226 = vmatpush1.bf16.msra.mxu0 %v1207
    %1227 = vmatprep.subr.bf16.mxu0 0
    %1228 = vmatpush1.bf16.msra.mxu0 %v1208
    %1229 = vmatprep.subr.bf16.mxu0 0
    %1230 = vmatpush1.bf16.msra.mxu0 %v1209
    %1231 = vmatprep.subr.bf16.mxu0 0
    %1232 = vmatpush1.bf16.msra.mxu0 %v1210
    %1233 = vmatprep.subr.bf16.mxu0 0
    %1234 = vmatpush1.bf16.msra.mxu0 %v1211
    %1235 = vmatprep.subr.bf16.mxu0 0
    %1236 = vmatpush1.bf16.msra.mxu0 %v1212
    %1237 = vmatprep.subr.bf16.mxu0 0
    %1238 = vmatpush1.bf16.msra.mxu0 0
    %1239 = vmatprep.subr.bf16.mxu0 0
    %1240 = vmatpush1.bf16.msra.mxu0 0
    %1241 = vmatprep.subr.bf16.mxu0 0
    %1242 = vmatpush1.bf16.msra.mxu0 0
    %1243 = vmatprep.subr.bf16.mxu0 0
    %1244 = vmatpush1.bf16.msra.mxu0 0
    %1245 = vmatprep.subr.bf16.mxu0 0
    %1246 = vmatpush1.bf16.msra.mxu0 0
    %1247 = vmatprep.subr.bf16.mxu0 0
    %1248 = vmatpush1.bf16.msra.mxu0 0
    %1249 = vmatprep.subr.bf16.mxu0 0
    %1250 = vmatpush1.bf16.msra.mxu0 0
    %1251 = vmatprep.subr.bf16.mxu0 0
    %1252 = vmatpush1.bf16.msra.mxu0 0
    %1253 = vmatprep.mubr.bf16.mxu0 0
    %1254 = vmatmul.mubr.bf16.gmra.mrb[0].mxu0 %v1149
    %v1255 = vpop.f32.mrb[0].mxu0
    %v1256 = vadd.f32 %v1171, %v1255
    %v1257 = vpop.f32.mrb[0].mxu0
    %v1258 = vpop.f32.mrb[0].mxu0
    %v1259 = vpop.f32.mrb[0].mxu0
    %1260 = vdwg.mxu0
    %v1261 = vmul.f32 %v1256, 0.5
    %v1262 = vmul.f32 %v1261, 1.442695
    %v1263 = vpow.pop %v1262
    %v1264 = vld [vmem:[%s1] sm:$0xff]
    %1266 = vrot.lane.b32.xlu0 %v1264, 8
    %v1267 = vpop.permute.xlu0 %1266
    %v1269 = vmul.f32 %v1263, %v1267
    %1271 = vrot.lane.b32.xlu0 %v1269, 120
    %v1272 = vpop.permute.xlu0 %1271
    %v1274 = vadd.f32 %v1256, %v1272
    %v1275 = vpack.c.bf16 %v1274, %v1274
    %v1276 = vld [vmem:[%s8] sm:$0xf]
    %v1277 = vld [vmem:[%s9] sm:$0x1]
    %v1279 = vlaneseq
    %v1280 = vshrl.u32 %v1279, 7
    %v1281 = vsub.s32 0, %v1280
    %v1282 = vrot.slane %v1277, %v1281
    %vm1284 = vcmask 64512
    %v1286 = vsel %vm1284, %v1275, 0
    %vm1288 = vcmask 1043456
    %v1290 = vsel %vm1288, %v1276, 0
    %1292 = vmatprep.subr.bf16.mxu0 0
    %1293 = vmatpush1.bf16.msra.mxu0 %v1290
    %1294 = vmatprep.subr.bf16.mxu0 0
    %1295 = vmatpush1.bf16.msra.mxu0 0
    %1296 = vmatprep.subr.bf16.mxu0 0
    %1297 = vmatpush1.bf16.msra.mxu0 0
    %1298 = vmatprep.subr.bf16.mxu0 0
    %1299 = vmatpush1.bf16.msra.mxu0 0
    %1300 = vmatprep.subr.bf16.mxu0 0
    %1301 = vmatpush1.bf16.msra.mxu0 0
    %1302 = vmatprep.subr.bf16.mxu0 0
    %1303 = vmatpush1.bf16.msra.mxu0 0
    %1304 = vmatprep.subr.bf16.mxu0 0
    %1305 = vmatpush1.bf16.msra.mxu0 0
    %1306 = vmatprep.subr.bf16.mxu0 0
    %1307 = vmatpush1.bf16.msra.mxu0 0
    %1308 = vmatprep.subr.bf16.mxu0 0
    %1309 = vmatpush1.bf16.msra.mxu0 0
    %1310 = vmatprep.subr.bf16.mxu0 0
    %1311 = vmatpush1.bf16.msra.mxu0 0
    %1312 = vmatprep.subr.bf16.mxu0 0
    %1313 = vmatpush1.bf16.msra.mxu0 0
    %1314 = vmatprep.subr.bf16.mxu0 0
    %1315 = vmatpush1.bf16.msra.mxu0 0
    %1316 = vmatprep.subr.bf16.mxu0 0
    %1317 = vmatpush1.bf16.msra.mxu0 0
    %1318 = vmatprep.subr.bf16.mxu0 0
    %1319 = vmatpush1.bf16.msra.mxu0 0
    %1320 = vmatprep.subr.bf16.mxu0 0
    %1321 = vmatpush1.bf16.msra.mxu0 0
    %1322 = vmatprep.subr.bf16.mxu0 0
    %1323 = vmatpush1.bf16.msra.mxu0 0
    %1324 = vmatprep.mubr.bf16.mxu0 0
    %1325 = vmatmul.mubr.bf16.gmra.mrb[0].mxu0 %v1286
    %v1326 = vpop.f32.mrb[0].mxu0
    %v1327 = vadd.f32 %v1282, %v1326
    %v1328 = vpop.f32.mrb[0].mxu0
    %v1329 = vpop.f32.mrb[0].mxu0
    %v1330 = vpop.f32.mrb[0].mxu0
    %1331 = vdwg.mxu0
    %v1332 = vmax.f32 %v1327, 0.0
    %v1333 = vpack.c.bf16 %v1332, %v1332
    %v1334 = vld [vmem:[#allocation7] sm:$0xff]
    %v1335 = vld [vmem:[#allocation7 + $0x8] sm:$0xff]
    %v1336 = vld [vmem:[#allocation7 + $0x10] sm:$0xff]
    %v1337 = vld [vmem:[#allocation7 + $0x18] sm:$0xff]
    %v1338 = vld [vmem:[#allocation7 + $0x20] sm:$0xff]
    %v1339 = vld [vmem:[#allocation7 + $0x28] sm:$0xff]
    %v1340 = vld [vmem:[#allocation7 + $0x30] sm:$0xff]
    %v1341 = vld [vmem:[#allocation7 + $0x38] sm:$0xff]
    %v1342 = vld [vmem:[#allocation7 + $0x40] sm:$0xff]
    %v1343 = vld [vmem:[#allocation7 + $0x48] sm:$0xff]
    %v1344 = vld [vmem:[#allocation7 + $0x50] sm:$0xff]
    %v1345 = vld [vmem:[#allocation7 + $0x58] sm:$0xff]
    %v1346 = vld [vmem:[#allocation7 + $0x60] sm:$0xff]
    %v1347 = vld [vmem:[#allocation7 + $0x68] sm:$0xff]
    %v1348 = vld [vmem:[#allocation7 + $0x70] sm:$0xff]
    %v1349 = vld [vmem:[#allocation7 + $0x78] sm:$0xff]
    %v1350 = vld [vmem:[%s11] sm:$0x3]
    %v1352 = vlaneseq
    %v1353 = vshrl.u32 %v1352, 7
    %v1354 = vsub.s32 0, %v1353
    %v1355 = vrot.slane %v1350, %v1354
    %v1356 = vlaneseq
    %v1357 = vshrl.u32 %v1356, 7
    %v1358 = vsub.s32 1, %v1357
    %v1359 = vrot.slane %v1350, %v1358
    %v1378 = vunpack.c.l.b16 %v1334
    %v1379 = vunpack.c.h.b16 %v1334
    %v1380 = vunpack.c.l.b16 %v1335
    %v1381 = vunpack.c.h.b16 %v1335
    %v1382 = vunpack.c.l.b16 %v1336
    %v1383 = vunpack.c.h.b16 %v1336
    %v1384 = vunpack.c.l.b16 %v1337
    %v1385 = vunpack.c.h.b16 %v1337
    %v1386 = vunpack.c.l.b16 %v1338
    %v1387 = vunpack.c.h.b16 %v1338
    %v1388 = vunpack.c.l.b16 %v1339
    %v1389 = vunpack.c.h.b16 %v1339
    %v1390 = vunpack.c.l.b16 %v1340
    %v1391 = vunpack.c.h.b16 %v1340
    %v1392 = vunpack.c.l.b16 %v1341
    %v1393 = vunpack.c.h.b16 %v1341
    %v1394 = vunpack.c.l.b16 %v1342
    %v1395 = vunpack.c.h.b16 %v1342
    %v1396 = vunpack.c.l.b16 %v1343
    %v1397 = vunpack.c.h.b16 %v1343
    %v1398 = vunpack.c.l.b16 %v1344
    %v1399 = vunpack.c.h.b16 %v1344
    %v1400 = vunpack.c.l.b16 %v1345
    %v1401 = vunpack.c.h.b16 %v1345
    %v1402 = vunpack.c.l.b16 %v1346
    %v1403 = vunpack.c.h.b16 %v1346
    %v1404 = vunpack.c.l.b16 %v1347
    %v1405 = vunpack.c.h.b16 %v1347
    %v1406 = vunpack.c.l.b16 %v1348
    %v1407 = vunpack.c.h.b16 %v1348
    %v1408 = vunpack.c.l.b16 %v1349
    %v1409 = vunpack.c.h.b16 %v1349
    %v1410 = vpack.c.b16 %v1380, %v1378
    %v1411 = vpack.c.b16 %v1381, %v1379
    %v1412 = vpack.c.b16 %v1384, %v1382
    %v1413 = vpack.c.b16 %v1385, %v1383
    %v1414 = vpack.c.b16 %v1388, %v1386
    %v1415 = vpack.c.b16 %v1389, %v1387
    %v1416 = vpack.c.b16 %v1392, %v1390
    %v1417 = vpack.c.b16 %v1393, %v1391
    %v1418 = vpack.c.b16 %v1396, %v1394
    %v1419 = vpack.c.b16 %v1397, %v1395
    %v1420 = vpack.c.b16 %v1400, %v1398
    %v1421 = vpack.c.b16 %v1401, %v1399
    %v1422 = vpack.c.b16 %v1404, %v1402
    %v1423 = vpack.c.b16 %v1405, %v1403
    %v1424 = vpack.c.b16 %v1408, %v1406
    %v1425 = vpack.c.b16 %v1409, %v1407
    %1442 = vmatprep.subr.bf16.mxu0 %v1411
    %1443 = vmatpush1.bf16.msra.mxu0 %v1410
    %1444 = vmatprep.subr.bf16.mxu0 %v1413
    %1445 = vmatpush1.bf16.msra.mxu0 %v1412
    %1446 = vmatprep.subr.bf16.mxu0 %v1415
    %1447 = vmatpush1.bf16.msra.mxu0 %v1414
    %1448 = vmatprep.subr.bf16.mxu0 %v1417
    %1449 = vmatpush1.bf16.msra.mxu0 %v1416
    %1450 = vmatprep.subr.bf16.mxu0 %v1419
    %1451 = vmatpush1.bf16.msra.mxu0 %v1418
    %1452 = vmatprep.subr.bf16.mxu0 %v1421
    %1453 = vmatpush1.bf16.msra.mxu0 %v1420
    %1454 = vmatprep.subr.bf16.mxu0 %v1423
    %1455 = vmatpush1.bf16.msra.mxu0 %v1422
    %1456 = vmatprep.subr.bf16.mxu0 %v1425
    %1457 = vmatpush1.bf16.msra.mxu0 %v1424
    %1458 = vmatprep.subr.bf16.mxu0 0
    %1459 = vmatpush1.bf16.msra.mxu0 0
    %1460 = vmatprep.subr.bf16.mxu0 0
    %1461 = vmatpush1.bf16.msra.mxu0 0
    %1462 = vmatprep.subr.bf16.mxu0 0
    %1463 = vmatpush1.bf16.msra.mxu0 0
    %1464 = vmatprep.subr.bf16.mxu0 0
    %1465 = vmatpush1.bf16.msra.mxu0 0
    %1466 = vmatprep.subr.bf16.mxu0 0
    %1467 = vmatpush1.bf16.msra.mxu0 0
    %1468 = vmatprep.subr.bf16.mxu0 0
    %1469 = vmatpush1.bf16.msra.mxu0 0
    %1470 = vmatprep.subr.bf16.mxu0 0
    %1471 = vmatpush1.bf16.msra.mxu0 0
    %1472 = vmatprep.subr.bf16.mxu0 0
    %1473 = vmatpush1.bf16.msra.mxu0 0
    %1474 = vmatprep.mubr.bf16.mxu0 0
    %1475 = vmatmul.mubr.bf16.gmra.mrb[0].mxu0 %v1333
    %v1476 = vpop.f32.mrb[0].mxu0
    %v1477 = vadd.f32 %v1355, %v1476
    %v1478 = vpop.f32.mrb[0].mxu0
    %v1479 = vadd.f32 %v1359, %v1478
    %v1480 = vpop.f32.mrb[0].mxu0
    %v1481 = vpop.f32.mrb[0].mxu0
    %1482 = vdwg.mxu0
    %v1483 = vmax.f32 %v1477, 0.0
    %v1484 = vmax.f32 %v1479, 0.0
    %v1485 = vpack.c.bf16 %v1483, %v1483
    %v1486 = vpack.c.bf16 %v1484, %v1484
    %v1487 = vld [vmem:[#allocation8] sm:$0xff]
    %v1488 = vld [vmem:[#allocation8 + $0x8] sm:$0xff]
    %v1489 = vld [vmem:[#allocation8 + $0x10] sm:$0xff]
    %v1490 = vld [vmem:[#allocation8 + $0x18] sm:$0xf]
    %v1491 = vld [vmem:[#allocation8 + $0x1c] sm:$0xff]
    %v1492 = vld [vmem:[#allocation8 + $0x24] sm:$0xff]
    %v1493 = vld [vmem:[#allocation8 + $0x2c] sm:$0xff]
    %v1494 = vld [vmem:[#allocation8 + $0x34] sm:$0xf]
    %v1495 = vld [vmem:[#allocation8 + $0x38] sm:$0xff]
    %v1496 = vld [vmem:[#allocation8 + $0x40] sm:$0xff]
    %v1497 = vld [vmem:[#allocation8 + $0x48] sm:$0xff]
    %v1498 = vld [vmem:[#allocation8 + $0x50] sm:$0xf]
    %v1499 = vld [vmem:[#allocation8 + $0x54] sm:$0xff]
    %v1500 = vld [vmem:[#allocation8 + $0x5c] sm:$0xff]
    %v1501 = vld [vmem:[#allocation8 + $0x64] sm:$0xff]
    %v1502 = vld [vmem:[#allocation8 + $0x6c] sm:$0xf]
    %v1503 = vld [vmem:[#allocation8 + $0x70] sm:$0xff]
    %v1504 = vld [vmem:[#allocation8 + $0x78] sm:$0xff]
    %v1505 = vld [vmem:[#allocation8 + $0x80] sm:$0xff]
    %v1506 = vld [vmem:[#allocation8 + $0x88] sm:$0xf]
    %v1507 = vld [vmem:[#allocation8 + $0x8c] sm:$0xff]
    %v1508 = vld [vmem:[#allocation8 + $0x94] sm:$0xff]
    %v1509 = vld [vmem:[#allocation8 + $0x9c] sm:$0xff]
    %v1510 = vld [vmem:[#allocation8 + $0xa4] sm:$0xf]
    %v1511 = vld [vmem:[#allocation8 + $0xa8] sm:$0xff]
    %v1512 = vld [vmem:[#allocation8 + $0xb0] sm:$0xff]
    %v1513 = vld [vmem:[#allocation8 + $0xb8] sm:$0xff]
    %v1514 = vld [vmem:[#allocation8 + $0xc0] sm:$0xf]
    %v1515 = vld [vmem:[#allocation8 + $0xc4] sm:$0xff]
    %v1516 = vld [vmem:[#allocation8 + $0xcc] sm:$0xff]
    %v1517 = vld [vmem:[#allocation8 + $0xd4] sm:$0xff]
    %v1518 = vld [vmem:[#allocation8 + $0xdc] sm:$0xf]
    %v1519 = vld [vmem:[#allocation8 + $0xe0] sm:$0xff]
    %v1520 = vld [vmem:[#allocation8 + $0xe8] sm:$0xff]
    %v1521 = vld [vmem:[#allocation8 + $0xf0] sm:$0xff]
    %v1522 = vld [vmem:[#allocation8 + $0xf8] sm:$0xf]
    %v1523 = vld [vmem:[#allocation8 + $0xfc] sm:$0xff]
    %v1524 = vld [vmem:[#allocation8 + $0x104] sm:$0xff]
    %v1525 = vld [vmem:[#allocation8 + $0x10c] sm:$0xff]
    %v1526 = vld [vmem:[#allocation8 + $0x114] sm:$0xf]
    %v1527 = vld [vmem:[#allocation8 + $0x118] sm:$0xff]
    %v1528 = vld [vmem:[#allocation8 + $0x120] sm:$0xff]
    %v1529 = vld [vmem:[#allocation8 + $0x128] sm:$0xff]
    %v1530 = vld [vmem:[#allocation8 + $0x130] sm:$0xf]
    %v1531 = vld [vmem:[#allocation8 + $0x134] sm:$0xff]
    %v1532 = vld [vmem:[#allocation8 + $0x13c] sm:$0xff]
    %v1533 = vld [vmem:[#allocation8 + $0x144] sm:$0xff]
    %v1534 = vld [vmem:[#allocation8 + $0x14c] sm:$0xf]
    %v1535 = vld [vmem:[#allocation8 + $0x150] sm:$0xff]
    %v1536 = vld [vmem:[#allocation8 + $0x158] sm:$0xff]
    %v1537 = vld [vmem:[#allocation8 + $0x160] sm:$0xff]
    %v1538 = vld [vmem:[#allocation8 + $0x168] sm:$0xf]
    %v1539 = vld [vmem:[#allocation8 + $0x16c] sm:$0xff]
    %v1540 = vld [vmem:[#allocation8 + $0x174] sm:$0xff]
    %v1541 = vld [vmem:[#allocation8 + $0x17c] sm:$0xff]
    %v1542 = vld [vmem:[#allocation8 + $0x184] sm:$0xf]
    %v1543 = vld [vmem:[#allocation8 + $0x188] sm:$0xff]
    %v1544 = vld [vmem:[#allocation8 + $0x190] sm:$0xff]
    %v1545 = vld [vmem:[#allocation8 + $0x198] sm:$0xff]
    %v1546 = vld [vmem:[#allocation8 + $0x1a0] sm:$0xf]
    %v1547 = vld [vmem:[#allocation8 + $0x1a4] sm:$0xff]
    %v1548 = vld [vmem:[#allocation8 + $0x1ac] sm:$0xff]
    %v1549 = vld [vmem:[#allocation8 + $0x1b4] sm:$0xff]
    %v1550 = vld [vmem:[#allocation8 + $0x1bc] sm:$0xf]
    %v1551 = vld [vmem:[#allocation8 + $0x1c0] sm:$0xff]
    %v1552 = vld [vmem:[#allocation8 + $0x1c8] sm:$0xff]
    %v1553 = vld [vmem:[#allocation8 + $0x1d0] sm:$0xff]
    %v1554 = vld [vmem:[#allocation8 + $0x1d8] sm:$0xf]
    %v1555 = vld [vmem:[#allocation8 + $0x1dc] sm:$0xff]
    %v1556 = vld [vmem:[#allocation8 + $0x1e4] sm:$0xff]
    %v1557 = vld [vmem:[#allocation8 + $0x1ec] sm:$0xff]
    %v1558 = vld [vmem:[#allocation8 + $0x1f4] sm:$0xf]
    %v1559 = vld [vmem:[#allocation8 + $0x1f8] sm:$0xff]
    %v1560 = vld [vmem:[#allocation8 + $0x200] sm:$0xff]
    %v1561 = vld [vmem:[#allocation8 + $0x208] sm:$0xff]
    %v1562 = vld [vmem:[#allocation8 + $0x210] sm:$0xf]
    %v1563 = vld [vmem:[#allocation8 + $0x214] sm:$0xff]
    %v1564 = vld [vmem:[#allocation8 + $0x21c] sm:$0xff]
    %v1565 = vld [vmem:[#allocation8 + $0x224] sm:$0xff]
    %v1566 = vld [vmem:[#allocation8 + $0x22c] sm:$0xf]
    %v1567 = vld [vmem:[#allocation8 + $0x230] sm:$0xff]
    %v1568 = vld [vmem:[#allocation8 + $0x238] sm:$0xff]
    %v1569 = vld [vmem:[#allocation8 + $0x240] sm:$0xff]
    %v1570 = vld [vmem:[#allocation8 + $0x248] sm:$0xf]
    %v1571 = vld [vmem:[#allocation8 + $0x24c] sm:$0xff]
    %v1572 = vld [vmem:[#allocation8 + $0x254] sm:$0xff]
    %v1573 = vld [vmem:[#allocation8 + $0x25c] sm:$0xff]
    %v1574 = vld [vmem:[#allocation8 + $0x264] sm:$0xf]
    %v1575 = vld [vmem:[#allocation8 + $0x268] sm:$0xff]
    %v1576 = vld [vmem:[#allocation8 + $0x270] sm:$0xff]
    %v1577 = vld [vmem:[#allocation8 + $0x278] sm:$0xff]
    %v1578 = vld [vmem:[#allocation8 + $0x280] sm:$0xf]
    %v1579 = vld [vmem:[#allocation8 + $0x284] sm:$0xff]
    %v1580 = vld [vmem:[#allocation8 + $0x28c] sm:$0xff]
    %v1581 = vld [vmem:[#allocation8 + $0x294] sm:$0xff]
    %v1582 = vld [vmem:[#allocation8 + $0x29c] sm:$0xf]
    %v1583 = vld [vmem:[#allocation8 + $0x2a0] sm:$0xff]
    %v1584 = vld [vmem:[#allocation8 + $0x2a8] sm:$0xff]
    %v1585 = vld [vmem:[#allocation8 + $0x2b0] sm:$0xff]
    %v1586 = vld [vmem:[#allocation8 + $0x2b8] sm:$0xf]
    %v1587 = vld [vmem:[#allocation8 + $0x2bc] sm:$0xff]
    %v1588 = vld [vmem:[#allocation8 + $0x2c4] sm:$0xff]
    %v1589 = vld [vmem:[#allocation8 + $0x2cc] sm:$0xff]
    %v1590 = vld [vmem:[#allocation8 + $0x2d4] sm:$0xf]
    %v1591 = vld [vmem:[#allocation8 + $0x2d8] sm:$0xff]
    %v1592 = vld [vmem:[#allocation8 + $0x2e0] sm:$0xff]
    %v1593 = vld [vmem:[#allocation8 + $0x2e8] sm:$0xff]
    %v1594 = vld [vmem:[#allocation8 + $0x2f0] sm:$0xf]
    %v1595 = vld [vmem:[#allocation8 + $0x2f4] sm:$0xff]
    %v1596 = vld [vmem:[#allocation8 + $0x2fc] sm:$0xff]
    %v1597 = vld [vmem:[#allocation8 + $0x304] sm:$0xff]
    %v1598 = vld [vmem:[#allocation8 + $0x30c] sm:$0xf]
    %v1599 = vld [vmem:[#allocation8 + $0x310] sm:$0xff]
    %v1600 = vld [vmem:[#allocation8 + $0x318] sm:$0xff]
    %v1601 = vld [vmem:[#allocation8 + $0x320] sm:$0xff]
    %v1602 = vld [vmem:[#allocation8 + $0x328] sm:$0xf]
    %v1603 = vld [vmem:[#allocation8 + $0x32c] sm:$0xff]
    %v1604 = vld [vmem:[#allocation8 + $0x334] sm:$0xff]
    %v1605 = vld [vmem:[#allocation8 + $0x33c] sm:$0xff]
    %v1606 = vld [vmem:[#allocation8 + $0x344] sm:$0xf]
    %v1607 = vld [vmem:[#allocation8 + $0x348] sm:$0xff]
    %v1608 = vld [vmem:[#allocation8 + $0x350] sm:$0xff]
    %v1609 = vld [vmem:[#allocation8 + $0x358] sm:$0xff]
    %v1610 = vld [vmem:[#allocation8 + $0x360] sm:$0xf]
    %v1611 = vld [vmem:[#allocation8 + $0x364] sm:$0xff]
    %v1612 = vld [vmem:[#allocation8 + $0x36c] sm:$0xff]
    %v1613 = vld [vmem:[#allocation8 + $0x374] sm:$0xff]
    %v1614 = vld [vmem:[#allocation8 + $0x37c] sm:$0xf]
    %v1615 = vld [vmem:[%s13] sm:$0xff]
    %v1617 = vlaneseq
    %v1618 = vshrl.u32 %v1617, 7
    %v1619 = vsub.s32 0, %v1618
    %v1620 = vrot.slane %v1615, %v1619
    %v1621 = vlaneseq
    %v1622 = vshrl.u32 %v1621, 7
    %v1623 = vsub.s32 1, %v1622
    %v1624 = vrot.slane %v1615, %v1623
    %v1625 = vlaneseq
    %v1626 = vshrl.u32 %v1625, 7
    %v1627 = vsub.s32 2, %v1626
    %v1628 = vrot.slane %v1615, %v1627
    %v1629 = vlaneseq
    %v1630 = vshrl.u32 %v1629, 7
    %v1631 = vsub.s32 3, %v1630
    %v1632 = vrot.slane %v1615, %v1631
    %v1633 = vlaneseq
    %v1634 = vshrl.u32 %v1633, 7
    %v1635 = vsub.s32 4, %v1634
    %v1636 = vrot.slane %v1615, %v1635
    %v1637 = vlaneseq
    %v1638 = vshrl.u32 %v1637, 7
    %v1639 = vsub.s32 5, %v1638
    %v1640 = vrot.slane %v1615, %v1639
    %v1641 = vlaneseq
    %v1642 = vshrl.u32 %v1641, 7
    %v1643 = vsub.s32 6, %v1642
    %v1644 = vrot.slane %v1615, %v1643
    %v1780 = vunpack.c.l.b16 %v1487
    %v1781 = vunpack.c.h.b16 %v1487
    %v1782 = vunpack.c.l.b16 %v1488
    %v1783 = vunpack.c.h.b16 %v1488
    %v1784 = vunpack.c.l.b16 %v1489
    %v1785 = vunpack.c.h.b16 %v1489
    %v1786 = vunpack.c.l.b16 %v1490
    %v1787 = vunpack.c.l.b16 %v1491
    %v1788 = vunpack.c.h.b16 %v1491
    %v1789 = vunpack.c.l.b16 %v1492
    %v1790 = vunpack.c.h.b16 %v1492
    %v1791 = vunpack.c.l.b16 %v1493
    %v1792 = vunpack.c.h.b16 %v1493
    %v1793 = vunpack.c.l.b16 %v1494
    %v1794 = vunpack.c.l.b16 %v1495
    %v1795 = vunpack.c.h.b16 %v1495
    %v1796 = vunpack.c.l.b16 %v1496
    %v1797 = vunpack.c.h.b16 %v1496
    %v1798 = vunpack.c.l.b16 %v1497
    %v1799 = vunpack.c.h.b16 %v1497
    %v1800 = vunpack.c.l.b16 %v1498
    %v1801 = vunpack.c.l.b16 %v1499
    %v1802 = vunpack.c.h.b16 %v1499
    %v1803 = vunpack.c.l.b16 %v1500
    %v1804 = vunpack.c.h.b16 %v1500
    %v1805 = vunpack.c.l.b16 %v1501
    %v1806 = vunpack.c.h.b16 %v1501
    %v1807 = vunpack.c.l.b16 %v1502
    %v1808 = vunpack.c.l.b16 %v1503
    %v1809 = vunpack.c.h.b16 %v1503
    %v1810 = vunpack.c.l.b16 %v1504
    %v1811 = vunpack.c.h.b16 %v1504
    %v1812 = vunpack.c.l.b16 %v1505
    %v1813 = vunpack.c.h.b16 %v1505
    %v1814 = vunpack.c.l.b16 %v1506
    %v1815 = vunpack.c.l.b16 %v1507
    %v1816 = vunpack.c.h.b16 %v1507
    %v1817 = vunpack.c.l.b16 %v1508
    %v1818 = vunpack.c.h.b16 %v1508
    %v1819 = vunpack.c.l.b16 %v1509
    %v1820 = vunpack.c.h.b16 %v1509
    %v1821 = vunpack.c.l.b16 %v1510
    %v1822 = vunpack.c.l.b16 %v1511
    %v1823 = vunpack.c.h.b16 %v1511
    %v1824 = vunpack.c.l.b16 %v1512
    %v1825 = vunpack.c.h.b16 %v1512
    %v1826 = vunpack.c.l.b16 %v1513
    %v1827 = vunpack.c.h.b16 %v1513
    %v1828 = vunpack.c.l.b16 %v1514
    %v1829 = vunpack.c.l.b16 %v1515
    %v1830 = vunpack.c.h.b16 %v1515
    %v1831 = vunpack.c.l.b16 %v1516
    %v1832 = vunpack.c.h.b16 %v1516
    %v1833 = vunpack.c.l.b16 %v1517
    %v1834 = vunpack.c.h.b16 %v1517
    %v1835 = vunpack.c.l.b16 %v1518
    %v1836 = vunpack.c.l.b16 %v1519
    %v1837 = vunpack.c.h.b16 %v1519
    %v1838 = vunpack.c.l.b16 %v1520
    %v1839 = vunpack.c.h.b16 %v1520
    %v1840 = vunpack.c.l.b16 %v1521
    %v1841 = vunpack.c.h.b16 %v1521
    %v1842 = vunpack.c.l.b16 %v1522
    %v1843 = vunpack.c.l.b16 %v1523
    %v1844 = vunpack.c.h.b16 %v1523
    %v1845 = vunpack.c.l.b16 %v1524
    %v1846 = vunpack.c.h.b16 %v1524
    %v1847 = vunpack.c.l.b16 %v1525
    %v1848 = vunpack.c.h.b16 %v1525
    %v1849 = vunpack.c.l.b16 %v1526
    %v1850 = vunpack.c.l.b16 %v1527
    %v1851 = vunpack.c.h.b16 %v1527
    %v1852 = vunpack.c.l.b16 %v1528
    %v1853 = vunpack.c.h.b16 %v1528
    %v1854 = vunpack.c.l.b16 %v1529
    %v1855 = vunpack.c.h.b16 %v1529
    %v1856 = vunpack.c.l.b16 %v1530
    %v1857 = vunpack.c.l.b16 %v1531
    %v1858 = vunpack.c.h.b16 %v1531
    %v1859 = vunpack.c.l.b16 %v1532
    %v1860 = vunpack.c.h.b16 %v1532
    %v1861 = vunpack.c.l.b16 %v1533
    %v1862 = vunpack.c.h.b16 %v1533
    %v1863 = vunpack.c.l.b16 %v1534
    %v1864 = vunpack.c.l.b16 %v1535
    %v1865 = vunpack.c.h.b16 %v1535
    %v1866 = vunpack.c.l.b16 %v1536
    %v1867 = vunpack.c.h.b16 %v1536
    %v1868 = vunpack.c.l.b16 %v1537
    %v1869 = vunpack.c.h.b16 %v1537
    %v1870 = vunpack.c.l.b16 %v1538
    %v1871 = vunpack.c.l.b16 %v1539
    %v1872 = vunpack.c.h.b16 %v1539
    %v1873 = vunpack.c.l.b16 %v1540
    %v1874 = vunpack.c.h.b16 %v1540
    %v1875 = vunpack.c.l.b16 %v1541
    %v1876 = vunpack.c.h.b16 %v1541
    %v1877 = vunpack.c.l.b16 %v1542
    %v1878 = vunpack.c.l.b16 %v1543
    %v1879 = vunpack.c.h.b16 %v1543
    %v1880 = vunpack.c.l.b16 %v1544
    %v1881 = vunpack.c.h.b16 %v1544
    %v1882 = vunpack.c.l.b16 %v1545
    %v1883 = vunpack.c.h.b16 %v1545
    %v1884 = vunpack.c.l.b16 %v1546
    %v1885 = vunpack.c.l.b16 %v1547
    %v1886 = vunpack.c.h.b16 %v1547
    %v1887 = vunpack.c.l.b16 %v1548
    %v1888 = vunpack.c.h.b16 %v1548
    %v1889 = vunpack.c.l.b16 %v1549
    %v1890 = vunpack.c.h.b16 %v1549
    %v1891 = vunpack.c.l.b16 %v1550
    %v1892 = vunpack.c.l.b16 %v1551
    %v1893 = vunpack.c.h.b16 %v1551
    %v1894 = vunpack.c.l.b16 %v1552
    %v1895 = vunpack.c.h.b16 %v1552
    %v1896 = vunpack.c.l.b16 %v1553
    %v1897 = vunpack.c.h.b16 %v1553
    %v1898 = vunpack.c.l.b16 %v1554
    %v1899 = vunpack.c.l.b16 %v1555
    %v1900 = vunpack.c.h.b16 %v1555
    %v1901 = vunpack.c.l.b16 %v1556
    %v1902 = vunpack.c.h.b16 %v1556
    %v1903 = vunpack.c.l.b16 %v1557
    %v1904 = vunpack.c.h.b16 %v1557
    %v1905 = vunpack.c.l.b16 %v1558
    %v1906 = vunpack.c.l.b16 %v1559
    %v1907 = vunpack.c.h.b16 %v1559
    %v1908 = vunpack.c.l.b16 %v1560
    %v1909 = vunpack.c.h.b16 %v1560
    %v1910 = vunpack.c.l.b16 %v1561
    %v1911 = vunpack.c.h.b16 %v1561
    %v1912 = vunpack.c.l.b16 %v1562
    %v1913 = vunpack.c.l.b16 %v1563
    %v1914 = vunpack.c.h.b16 %v1563
    %v1915 = vunpack.c.l.b16 %v1564
    %v1916 = vunpack.c.h.b16 %v1564
    %v1917 = vunpack.c.l.b16 %v1565
    %v1918 = vunpack.c.h.b16 %v1565
    %v1919 = vunpack.c.l.b16 %v1566
    %v1920 = vunpack.c.l.b16 %v1567
    %v1921 = vunpack.c.h.b16 %v1567
    %v1922 = vunpack.c.l.b16 %v1568
    %v1923 = vunpack.c.h.b16 %v1568
    %v1924 = vunpack.c.l.b16 %v1569
    %v1925 = vunpack.c.h.b16 %v1569
    %v1926 = vunpack.c.l.b16 %v1570
    %v1927 = vunpack.c.l.b16 %v1571
    %v1928 = vunpack.c.h.b16 %v1571
    %v1929 = vunpack.c.l.b16 %v1572
    %v1930 = vunpack.c.h.b16 %v1572
    %v1931 = vunpack.c.l.b16 %v1573
    %v1932 = vunpack.c.h.b16 %v1573
    %v1933 = vunpack.c.l.b16 %v1574
    %v1934 = vunpack.c.l.b16 %v1575
    %v1935 = vunpack.c.h.b16 %v1575
    %v1936 = vunpack.c.l.b16 %v1576
    %v1937 = vunpack.c.h.b16 %v1576
    %v1938 = vunpack.c.l.b16 %v1577
    %v1939 = vunpack.c.h.b16 %v1577
    %v1940 = vunpack.c.l.b16 %v1578
    %v1941 = vunpack.c.l.b16 %v1579
    %v1942 = vunpack.c.h.b16 %v1579
    %v1943 = vunpack.c.l.b16 %v1580
    %v1944 = vunpack.c.h.b16 %v1580
    %v1945 = vunpack.c.l.b16 %v1581
    %v1946 = vunpack.c.h.b16 %v1581
    %v1947 = vunpack.c.l.b16 %v1582
    %v1948 = vunpack.c.l.b16 %v1583
    %v1949 = vunpack.c.h.b16 %v1583
    %v1950 = vunpack.c.l.b16 %v1584
    %v1951 = vunpack.c.h.b16 %v1584
    %v1952 = vunpack.c.l.b16 %v1585
    %v1953 = vunpack.c.h.b16 %v1585
    %v1954 = vunpack.c.l.b16 %v1586
    %v1955 = vunpack.c.l.b16 %v1587
    %v1956 = vunpack.c.h.b16 %v1587
    %v1957 = vunpack.c.l.b16 %v1588
    %v1958 = vunpack.c.h.b16 %v1588
    %v1959 = vunpack.c.l.b16 %v1589
    %v1960 = vunpack.c.h.b16 %v1589
    %v1961 = vunpack.c.l.b16 %v1590
    %v1962 = vunpack.c.l.b16 %v1591
    %v1963 = vunpack.c.h.b16 %v1591
    %v1964 = vunpack.c.l.b16 %v1592
    %v1965 = vunpack.c.h.b16 %v1592
    %v1966 = vunpack.c.l.b16 %v1593
    %v1967 = vunpack.c.h.b16 %v1593
    %v1968 = vunpack.c.l.b16 %v1594
    %v1969 = vunpack.c.l.b16 %v1595
    %v1970 = vunpack.c.h.b16 %v1595
    %v1971 = vunpack.c.l.b16 %v1596
    %v1972 = vunpack.c.h.b16 %v1596
    %v1973 = vunpack.c.l.b16 %v1597
    %v1974 = vunpack.c.h.b16 %v1597
    %v1975 = vunpack.c.l.b16 %v1598
    %v1976 = vunpack.c.l.b16 %v1599
    %v1977 = vunpack.c.h.b16 %v1599
    %v1978 = vunpack.c.l.b16 %v1600
    %v1979 = vunpack.c.h.b16 %v1600
    %v1980 = vunpack.c.l.b16 %v1601
    %v1981 = vunpack.c.h.b16 %v1601
    %v1982 = vunpack.c.l.b16 %v1602
    %v1983 = vunpack.c.l.b16 %v1603
    %v1984 = vunpack.c.h.b16 %v1603
    %v1985 = vunpack.c.l.b16 %v1604
    %v1986 = vunpack.c.h.b16 %v1604
    %v1987 = vunpack.c.l.b16 %v1605
    %v1988 = vunpack.c.h.b16 %v1605
    %v1989 = vunpack.c.l.b16 %v1606
    %v1990 = vunpack.c.l.b16 %v1607
    %v1991 = vunpack.c.h.b16 %v1607
    %v1992 = vunpack.c.l.b16 %v1608
    %v1993 = vunpack.c.h.b16 %v1608
    %v1994 = vunpack.c.l.b16 %v1609
    %v1995 = vunpack.c.h.b16 %v1609
    %v1996 = vunpack.c.l.b16 %v1610
    %v1997 = vunpack.c.l.b16 %v1611
    %v1998 = vunpack.c.h.b16 %v1611
    %v1999 = vunpack.c.l.b16 %v1612
    %v2000 = vunpack.c.h.b16 %v1612
    %v2001 = vunpack.c.l.b16 %v1613
    %v2002 = vunpack.c.h.b16 %v1613
    %v2003 = vunpack.c.l.b16 %v1614
    %v2004 = vpack.c.b16 %v1787, %v1780
    %v2005 = vpack.c.b16 %v1788, %v1781
    %v2006 = vpack.c.b16 %v1789, %v1782
    %v2007 = vpack.c.b16 %v1790, %v1783
    %v2008 = vpack.c.b16 %v1791, %v1784
    %v2009 = vpack.c.b16 %v1792, %v1785
    %v2010 = vpack.c.b16 %v1793, %v1786
    %v2011 = vpack.c.b16 %v1801, %v1794
    %v2012 = vpack.c.b16 %v1802, %v1795
    %v2013 = vpack.c.b16 %v1803, %v1796
    %v2014 = vpack.c.b16 %v1804, %v1797
    %v2015 = vpack.c.b16 %v1805, %v1798
    %v2016 = vpack.c.b16 %v1806, %v1799
    %v2017 = vpack.c.b16 %v1807, %v1800
    %v2018 = vpack.c.b16 %v1815, %v1808
    %v2019 = vpack.c.b16 %v1816, %v1809
    %v2020 = vpack.c.b16 %v1817, %v1810
    %v2021 = vpack.c.b16 %v1818, %v1811
    %v2022 = vpack.c.b16 %v1819, %v1812
    %v2023 = vpack.c.b16 %v1820, %v1813
    %v2024 = vpack.c.b16 %v1821, %v1814
    %v2025 = vpack.c.b16 %v1829, %v1822
    %v2026 = vpack.c.b16 %v1830, %v1823
    %v2027 = vpack.c.b16 %v1831, %v1824
    %v2028 = vpack.c.b16 %v1832, %v1825
    %v2029 = vpack.c.b16 %v1833, %v1826
    %v2030 = vpack.c.b16 %v1834, %v1827
    %v2031 = vpack.c.b16 %v1835, %v1828
    %v2032 = vpack.c.b16 %v1843, %v1836
    %v2033 = vpack.c.b16 %v1844, %v1837
    %v2034 = vpack.c.b16 %v1845, %v1838
    %v2035 = vpack.c.b16 %v1846, %v1839
    %v2036 = vpack.c.b16 %v1847, %v1840
    %v2037 = vpack.c.b16 %v1848, %v1841
    %v2038 = vpack.c.b16 %v1849, %v1842
    %v2039 = vpack.c.b16 %v1857, %v1850
    %v2040 = vpack.c.b16 %v1858, %v1851
    %v2041 = vpack.c.b16 %v1859, %v1852
    %v2042 = vpack.c.b16 %v1860, %v1853
    %v2043 = vpack.c.b16 %v1861, %v1854
    %v2044 = vpack.c.b16 %v1862, %v1855
    %v2045 = vpack.c.b16 %v1863, %v1856
    %v2046 = vpack.c.b16 %v1871, %v1864
    %v2047 = vpack.c.b16 %v1872, %v1865
    %v2048 = vpack.c.b16 %v1873, %v1866
    %v2049 = vpack.c.b16 %v1874, %v1867
    %v2050 = vpack.c.b16 %v1875, %v1868
    %v2051 = vpack.c.b16 %v1876, %v1869
    %v2052 = vpack.c.b16 %v1877, %v1870
    %v2053 = vpack.c.b16 %v1885, %v1878
    %v2054 = vpack.c.b16 %v1886, %v1879
    %v2055 = vpack.c.b16 %v1887, %v1880
    %v2056 = vpack.c.b16 %v1888, %v1881
    %v2057 = vpack.c.b16 %v1889, %v1882
    %v2058 = vpack.c.b16 %v1890, %v1883
    %v2059 = vpack.c.b16 %v1891, %v1884
    %v2060 = vpack.c.b16 %v1899, %v1892
    %v2061 = vpack.c.b16 %v1900, %v1893
    %v2062 = vpack.c.b16 %v1901, %v1894
    %v2063 = vpack.c.b16 %v1902, %v1895
    %v2064 = vpack.c.b16 %v1903, %v1896
    %v2065 = vpack.c.b16 %v1904, %v1897
    %v2066 = vpack.c.b16 %v1905, %v1898
    %v2067 = vpack.c.b16 %v1913, %v1906
    %v2068 = vpack.c.b16 %v1914, %v1907
    %v2069 = vpack.c.b16 %v1915, %v1908
    %v2070 = vpack.c.b16 %v1916, %v1909
    %v2071 = vpack.c.b16 %v1917, %v1910
    %v2072 = vpack.c.b16 %v1918, %v1911
    %v2073 = vpack.c.b16 %v1919, %v1912
    %v2074 = vpack.c.b16 %v1927, %v1920
    %v2075 = vpack.c.b16 %v1928, %v1921
    %v2076 = vpack.c.b16 %v1929, %v1922
    %v2077 = vpack.c.b16 %v1930, %v1923
    %v2078 = vpack.c.b16 %v1931, %v1924
    %v2079 = vpack.c.b16 %v1932, %v1925
    %v2080 = vpack.c.b16 %v1933, %v1926
    %v2081 = vpack.c.b16 %v1941, %v1934
    %v2082 = vpack.c.b16 %v1942, %v1935
    %v2083 = vpack.c.b16 %v1943, %v1936
    %v2084 = vpack.c.b16 %v1944, %v1937
    %v2085 = vpack.c.b16 %v1945, %v1938
    %v2086 = vpack.c.b16 %v1946, %v1939
    %v2087 = vpack.c.b16 %v1947, %v1940
    %v2088 = vpack.c.b16 %v1955, %v1948
    %v2089 = vpack.c.b16 %v1956, %v1949
    %v2090 = vpack.c.b16 %v1957, %v1950
    %v2091 = vpack.c.b16 %v1958, %v1951
    %v2092 = vpack.c.b16 %v1959, %v1952
    %v2093 = vpack.c.b16 %v1960, %v1953
    %v2094 = vpack.c.b16 %v1961, %v1954
    %v2095 = vpack.c.b16 %v1969, %v1962
    %v2096 = vpack.c.b16 %v1970, %v1963
    %v2097 = vpack.c.b16 %v1971, %v1964
    %v2098 = vpack.c.b16 %v1972, %v1965
    %v2099 = vpack.c.b16 %v1973, %v1966
    %v2100 = vpack.c.b16 %v1974, %v1967
    %v2101 = vpack.c.b16 %v1975, %v1968
    %v2102 = vpack.c.b16 %v1983, %v1976
    %v2103 = vpack.c.b16 %v1984, %v1977
    %v2104 = vpack.c.b16 %v1985, %v1978
    %v2105 = vpack.c.b16 %v1986, %v1979
    %v2106 = vpack.c.b16 %v1987, %v1980
    %v2107 = vpack.c.b16 %v1988, %v1981
    %v2108 = vpack.c.b16 %v1989, %v1982
    %v2109 = vpack.c.b16 %v1997, %v1990
    %v2110 = vpack.c.b16 %v1998, %v1991
    %v2111 = vpack.c.b16 %v1999, %v1992
    %v2112 = vpack.c.b16 %v2000, %v1993
    %v2113 = vpack.c.b16 %v2001, %v1994
    %v2114 = vpack.c.b16 %v2002, %v1995
    %v2115 = vpack.c.b16 %v2003, %v1996
    %2228 = vmatprep.subr.bf16.mxu0 %v2005
    %2229 = vmatpush1.bf16.msra.mxu0 %v2004
    %2230 = vmatprep.subr.bf16.mxu0 %v2012
    %2231 = vmatpush1.bf16.msra.mxu0 %v2011
    %2232 = vmatprep.subr.bf16.mxu0 %v2019
    %2233 = vmatpush1.bf16.msra.mxu0 %v2018
    %2234 = vmatprep.subr.bf16.mxu0 %v2026
    %2235 = vmatpush1.bf16.msra.mxu0 %v2025
    %2236 = vmatprep.subr.bf16.mxu0 %v2033
    %2237 = vmatpush1.bf16.msra.mxu0 %v2032
    %2238 = vmatprep.subr.bf16.mxu0 %v2040
    %2239 = vmatpush1.bf16.msra.mxu0 %v2039
    %2240 = vmatprep.subr.bf16.mxu0 %v2047
    %2241 = vmatpush1.bf16.msra.mxu0 %v2046
    %2242 = vmatprep.subr.bf16.mxu0 %v2054
    %2243 = vmatpush1.bf16.msra.mxu0 %v2053
    %2244 = vmatprep.subr.bf16.mxu0 %v2061
    %2245 = vmatpush1.bf16.msra.mxu0 %v2060
    %2246 = vmatprep.subr.bf16.mxu0 %v2068
    %2247 = vmatpush1.bf16.msra.mxu0 %v2067
    %2248 = vmatprep.subr.bf16.mxu0 %v2075
    %2249 = vmatpush1.bf16.msra.mxu0 %v2074
    %2250 = vmatprep.subr.bf16.mxu0 %v2082
    %2251 = vmatpush1.bf16.msra.mxu0 %v2081
    %2252 = vmatprep.subr.bf16.mxu0 %v2089
    %2253 = vmatpush1.bf16.msra.mxu0 %v2088
    %2254 = vmatprep.subr.bf16.mxu0 %v2096
    %2255 = vmatpush1.bf16.msra.mxu0 %v2095
    %2256 = vmatprep.subr.bf16.mxu0 %v2103
    %2257 = vmatpush1.bf16.msra.mxu0 %v2102
    %2258 = vmatprep.subr.bf16.mxu0 %v2110
    %2259 = vmatpush1.bf16.msra.mxu0 %v2109
    %2260 = vmatprep.mubr.bf16.mxu0 %v1486
    %2261 = vmatmul.mubr.bf16.gmra.mrb[0].mxu0 %v1485
    %v2262 = vpop.f32.mrb[0].mxu0
    %v2263 = vadd.f32 %v1620, %v2262
    %v2264 = vpop.f32.mrb[0].mxu0
    %v2265 = vadd.f32 %v1624, %v2264
    %v2266 = vpop.f32.mrb[0].mxu0
    %v2267 = vpop.f32.mrb[0].mxu0
    %2268 = vdwg.mxu0
    %2269 = vmatprep.subr.bf16.mxu0 %v2007
    %2270 = vmatpush1.bf16.msra.mxu0 %v2006
    %2271 = vmatprep.subr.bf16.mxu0 %v2014
    %2272 = vmatpush1.bf16.msra.mxu0 %v2013
    %2273 = vmatprep.subr.bf16.mxu0 %v2021
    %2274 = vmatpush1.bf16.msra.mxu0 %v2020
    %2275 = vmatprep.subr.bf16.mxu0 %v2028
    %2276 = vmatpush1.bf16.msra.mxu0 %v2027
    %2277 = vmatprep.subr.bf16.mxu0 %v2035
    %2278 = vmatpush1.bf16.msra.mxu0 %v2034
    %2279 = vmatprep.subr.bf16.mxu0 %v2042
    %2280 = vmatpush1.bf16.msra.mxu0 %v2041
    %2281 = vmatprep.subr.bf16.mxu0 %v2049
    %2282 = vmatpush1.bf16.msra.mxu0 %v2048
    %2283 = vmatprep.subr.bf16.mxu0 %v2056
    %2284 = vmatpush1.bf16.msra.mxu0 %v2055
    %2285 = vmatprep.subr.bf16.mxu0 %v2063
    %2286 = vmatpush1.bf16.msra.mxu0 %v2062
    %2287 = vmatprep.subr.bf16.mxu0 %v2070
    %2288 = vmatpush1.bf16.msra.mxu0 %v2069
    %2289 = vmatprep.subr.bf16.mxu0 %v2077
    %2290 = vmatpush1.bf16.msra.mxu0 %v2076
    %2291 = vmatprep.subr.bf16.mxu0 %v2084
    %2292 = vmatpush1.bf16.msra.mxu0 %v2083
    %2293 = vmatprep.subr.bf16.mxu0 %v2091
    %2294 = vmatpush1.bf16.msra.mxu0 %v2090
    %2295 = vmatprep.subr.bf16.mxu0 %v2098
    %2296 = vmatpush1.bf16.msra.mxu0 %v2097
    %2297 = vmatprep.subr.bf16.mxu0 %v2105
    %2298 = vmatpush1.bf16.msra.mxu0 %v2104
    %2299 = vmatprep.subr.bf16.mxu0 %v2112
    %2300 = vmatpush1.bf16.msra.mxu0 %v2111
    %2301 = vmatprep.mubr.bf16.mxu0 %v1486
    %2302 = vmatmul.mubr.bf16.gmra.mrb[0].mxu0 %v1485
    %v2303 = vpop.f32.mrb[0].mxu0
    %v2304 = vadd.f32 %v1628, %v2303
    %v2305 = vpop.f32.mrb[0].mxu0
    %v2306 = vadd.f32 %v1632, %v2305
    %v2307 = vpop.f32.mrb[0].mxu0
    %v2308 = vpop.f32.mrb[0].mxu0
    %2309 = vdwg.mxu0
    %2310 = vmatprep.subr.bf16.mxu0 %v2009
    %2311 = vmatpush1.bf16.msra.mxu0 %v2008
    %2312 = vmatprep.subr.bf16.mxu0 %v2016
    %2313 = vmatpush1.bf16.msra.mxu0 %v2015
    %2314 = vmatprep.subr.bf16.mxu0 %v2023
    %2315 = vmatpush1.bf16.msra.mxu0 %v2022
    %2316 = vmatprep.subr.bf16.mxu0 %v2030
    %2317 = vmatpush1.bf16.msra.mxu0 %v2029
    %2318 = vmatprep.subr.bf16.mxu0 %v2037
    %2319 = vmatpush1.bf16.msra.mxu0 %v2036
    %2320 = vmatprep.subr.bf16.mxu0 %v2044
    %2321 = vmatpush1.bf16.msra.mxu0 %v2043
    %2322 = vmatprep.subr.bf16.mxu0 %v2051
    %2323 = vmatpush1.bf16.msra.mxu0 %v2050
    %2324 = vmatprep.subr.bf16.mxu0 %v2058
    %2325 = vmatpush1.bf16.msra.mxu0 %v2057
    %2326 = vmatprep.subr.bf16.mxu0 %v2065
    %2327 = vmatpush1.bf16.msra.mxu0 %v2064
    %2328 = vmatprep.subr.bf16.mxu0 %v2072
    %2329 = vmatpush1.bf16.msra.mxu0 %v2071
    %2330 = vmatprep.subr.bf16.mxu0 %v2079
    %2331 = vmatpush1.bf16.msra.mxu0 %v2078
    %2332 = vmatprep.subr.bf16.mxu0 %v2086
    %2333 = vmatpush1.bf16.msra.mxu0 %v2085
    %2334 = vmatprep.subr.bf16.mxu0 %v2093
    %2335 = vmatpush1.bf16.msra.mxu0 %v2092
    %2336 = vmatprep.subr.bf16.mxu0 %v2100
    %2337 = vmatpush1.bf16.msra.mxu0 %v2099
    %2338 = vmatprep.subr.bf16.mxu0 %v2107
    %2339 = vmatpush1.bf16.msra.mxu0 %v2106
    %2340 = vmatprep.subr.bf16.mxu0 %v2114
    %2341 = vmatpush1.bf16.msra.mxu0 %v2113
    %2342 = vmatprep.mubr.bf16.mxu0 %v1486
    %2343 = vmatmul.mubr.bf16.gmra.mrb[0].mxu0 %v1485
    %v2344 = vpop.f32.mrb[0].mxu0
    %v2345 = vadd.f32 %v1636, %v2344
    %v2346 = vpop.f32.mrb[0].mxu0
    %v2347 = vadd.f32 %v1640, %v2346
    %v2348 = vpop.f32.mrb[0].mxu0
    %v2349 = vpop.f32.mrb[0].mxu0
    %2350 = vdwg.mxu0
    %2351 = vmatprep.subr.bf16.mxu0 0
    %2352 = vmatpush1.bf16.msra.mxu0 %v2010
    %2353 = vmatprep.subr.bf16.mxu0 0
    %2354 = vmatpush1.bf16.msra.mxu0 %v2017
    %2355 = vmatprep.subr.bf16.mxu0 0
    %2356 = vmatpush1.bf16.msra.mxu0 %v2024
    %2357 = vmatprep.subr.bf16.mxu0 0
    %2358 = vmatpush1.bf16.msra.mxu0 %v2031
    %2359 = vmatprep.subr.bf16.mxu0 0
    %2360 = vmatpush1.bf16.msra.mxu0 %v2038
    %2361 = vmatprep.subr.bf16.mxu0 0
    %2362 = vmatpush1.bf16.msra.mxu0 %v2045
    %2363 = vmatprep.subr.bf16.mxu0 0
    %2364 = vmatpush1.bf16.msra.mxu0 %v2052
    %2365 = vmatprep.subr.bf16.mxu0 0
    %2366 = vmatpush1.bf16.msra.mxu0 %v2059
    %2367 = vmatprep.subr.bf16.mxu0 0
    %2368 = vmatpush1.bf16.msra.mxu0 %v2066
    %2369 = vmatprep.subr.bf16.mxu0 0
    %2370 = vmatpush1.bf16.msra.mxu0 %v2073
    %2371 = vmatprep.subr.bf16.mxu0 0
    %2372 = vmatpush1.bf16.msra.mxu0 %v2080
    %2373 = vmatprep.subr.bf16.mxu0 0
    %2374 = vmatpush1.bf16.msra.mxu0 %v2087
    %2375 = vmatprep.subr.bf16.mxu0 0
    %2376 = vmatpush1.bf16.msra.mxu0 %v2094
    %2377 = vmatprep.subr.bf16.mxu0 0
    %2378 = vmatpush1.bf16.msra.mxu0 %v2101
    %2379 = vmatprep.subr.bf16.mxu0 0
    %2380 = vmatpush1.bf16.msra.mxu0 %v2108
    %2381 = vmatprep.subr.bf16.mxu0 0
    %2382 = vmatpush1.bf16.msra.mxu0 %v2115
    %2383 = vmatprep.mubr.bf16.mxu0 %v1486
    %2384 = vmatmul.mubr.bf16.gmra.mrb[0].mxu0 %v1485
    %v2385 = vpop.f32.mrb[0].mxu0
    %v2386 = vadd.f32 %v1644, %v2385
    %v2387 = vpop.f32.mrb[0].mxu0
    %v2388 = vpop.f32.mrb[0].mxu0
    %v2389 = vpop.f32.mrb[0].mxu0
    %2390 = vdwg.mxu0
    %v2391 = vsub.f32 0.0, %v2263
    %v2392 = vsub.f32 0.0, %v2265
    %v2393 = vsub.f32 0.0, %v2304
    %v2394 = vsub.f32 0.0, %v2306
    %v2395 = vsub.f32 0.0, %v2345
    %v2396 = vsub.f32 0.0, %v2347
    %v2397 = vsub.f32 0.0, %v2386
    %v2398 = vmul.f32 %v2391, 1.442695
    %v2399 = vpow.pop %v2398
    %v2400 = vmul.f32 %v2392, 1.442695
    %v2401 = vpow.pop %v2400
    %v2402 = vmul.f32 %v2393, 1.442695
    %v2403 = vpow.pop %v2402
    %v2404 = vmul.f32 %v2394, 1.442695
    %v2405 = vpow.pop %v2404
    %v2406 = vmul.f32 %v2395, 1.442695
    %v2407 = vpow.pop %v2406
    %v2408 = vmul.f32 %v2396, 1.442695
    %v2409 = vpow.pop %v2408
    %v2410 = vmul.f32 %v2397, 1.442695
    %v2411 = vpow.pop %v2410
    %v2412 = vadd.f32 %v2399, 1.0
    %v2413 = vadd.f32 %v2401, 1.0
    %v2414 = vadd.f32 %v2403, 1.0
    %v2415 = vadd.f32 %v2405, 1.0
    %v2416 = vadd.f32 %v2407, 1.0
    %v2417 = vadd.f32 %v2409, 1.0
    %v2418 = vadd.f32 %v2411, 1.0
    %v2419 = vrcp.pop %v2412
    %v2420 = vrcp.pop %v2413
    %v2421 = vrcp.pop %v2414
    %v2422 = vrcp.pop %v2415
    %v2423 = vrcp.pop %v2416
    %v2424 = vrcp.pop %v2417
    %v2425 = vrcp.pop %v2418
    %2426 = vst [vmem:[#allocation10] sm:$0xff] %v2419
    %2427 = vst [vmem:[#allocation10 + $0x8] sm:$0xff] %v2420
    %2428 = vst [vmem:[#allocation10 + $0x10] sm:$0xff] %v2421
    %2429 = vst [vmem:[#allocation10 + $0x18] sm:$0xff] %v2422
    %2430 = vst [vmem:[#allocation10 + $0x20] sm:$0xff] %v2423
    %2431 = vst [vmem:[#allocation10 + $0x28] sm:$0xff] %v2424
    %2432 = vst [vmem:[#allocation10 + $0x30] sm:$0xff] %v2425
    %2433 = vst [vmem:[#allocation11] sm:$0xff] 0.0
    %vm2434 = vcmask 130048
    %2435 = vst.msk [vmem:[#allocation11] sm:$0xff] %vm2434, %v1256
    %2437 = vrot.lane.b32.xlu0 %v1274, 16
    %v2438 = vpop.permute.xlu0 %2437
    %vm2440 = vcmask 195712
    %2441 = vst.msk [vmem:[#allocation11] sm:$0xff] %vm2440, %v2438
    // Predicated region
    $region74: #{tpu_custom_call.1} parent=1 // pred_check
      _
    $region75: #{tpu_custom_call.1} parent=1 // pred_check_branch
      %2443 = sbr.rel (0) target = $region77
    $region76: #{tpu_custom_call.1} parent=1 // pred_region
      %s2445 = ssub.s32 896, 896
      %2446 = vsyncadd [#allocation4], %s2445
      %s2448 = sshll.u32 [#allocation10], 4
      %s2449 = int_to_ptr.vmem [resolvable:$true] %s2448
      %2451 = dma.vmem_to_hbm [thread:$0]  %s2449, 896, %s14, [#allocation4]
    $region77: #{tpu_custom_call.1} parent=1 // pred_fallthru
      _
    // Predicated region
    $region78: #{tpu_custom_call.1} parent=1 // pred_check
      _
    $region79: #{tpu_custom_call.1} parent=1 // pred_check_branch
      %2453 = sbr.rel (0) target = $region81
    $region80: #{tpu_custom_call.1} parent=1 // pred_region
      %s2455 = ssub.s32 128, 128
      %2456 = vsyncadd [#allocation12], %s2455
      %s2458 = sshll.u32 [#allocation11], 4
      %s2459 = int_to_ptr.vmem [resolvable:$true] %s2458
      %2461 = dma.vmem_to_hbm [thread:$0]  %s2459, 128, %s15, [#allocation12]
    $region81: #{tpu_custom_call.1} parent=1 // pred_fallthru
      _
    // Predicated region
    $region82: #{tpu_custom_call.1} parent=1 // pred_check
      _
    $region83: #{tpu_custom_call.1} parent=1 // pred_check_branch
      %2463 = sbr.rel (0) target = $region85
    $region84: #{tpu_custom_call.1} parent=1 // pred_region
      %2464 = dma.done [#allocation4], 896
    $region85: #{tpu_custom_call.1} parent=1 // pred_fallthru
      _
    // Predicated region
    $region86: #{tpu_custom_call.1} parent=1 // pred_check
      _
    $region87: #{tpu_custom_call.1} parent=1 // pred_check_branch
      %2466 = sbr.rel (0) target = $region89
    $region88: #{tpu_custom_call.1} parent=1 // pred_region
      %2467 = dma.done [#allocation12], 128
    $region89: #{tpu_custom_call.1} parent=1 // pred_fallthru
      _
    %2468 = vsyncpa [#allocation3], 1
    %2469 = vsyncpa [#allocation6], 1
    %2470 = vsyncpa [#allocation9], 1
    %2471 = vsyncpa [#allocation4], 1
    %2472 = vsyncpa [#allocation12], 1

</llo_original>
